<compile_context>
chip_gen: v7x
topology: tpu7x:2x2x1
jax: 0.10.0
libtpu: 0.0.40
codegen_flags: <defaults>
</compile_context>

<pallas_src>
import functools

import jax
import jax.numpy as jnp
from jax import lax
from jax.experimental import pallas as pl
from jax.experimental.pallas import tpu as pltpu


def _attention_vit_kernel(x_ref, g_ref, b_ref, wqkv_ref, wout_ref, bout_ref,
                          o_ref, *, heads, dim_head, scale, eps):
    # x_ref: (N, D) for the current batch element (leading batch dim squeezed).
    x = x_ref[...].astype(jnp.float32)                        # (N, D)

    # --- LayerNorm over the feature dim (torch nn.LayerNorm semantics) ---
    mu = jnp.mean(x, axis=-1, keepdims=True)
    var = jnp.mean(jnp.square(x - mu), axis=-1, keepdims=True)
    xn = (x - mu) * lax.rsqrt(var + eps)
    xn = xn * g_ref[...].astype(jnp.float32) + b_ref[...].astype(jnp.float32)

    # --- QKV projection: single MXU matmul -> (N, 3*H*Dh) ---
    qkv = jnp.dot(xn, wqkv_ref[...].astype(jnp.float32),
                  preferred_element_type=jnp.float32)

    inner = heads * dim_head

    # --- Per-head scaled dot-product attention (static, unrolled over heads) ---
    head_outs = []
    for h in range(heads):
        q_h = qkv[:, h * dim_head:(h + 1) * dim_head]                       # (N, Dh)
        k_h = qkv[:, inner + h * dim_head:inner + (h + 1) * dim_head]       # (N, Dh)
        v_h = qkv[:, 2 * inner + h * dim_head:2 * inner + (h + 1) * dim_head]

        # q_h @ k_h^T : contract on the head dim of both operands (MXU).
        dots = lax.dot_general(q_h, k_h, (((1,), (1,)), ((), ())),
                               preferred_element_type=jnp.float32) * scale   # (N, N)

        # Numerically-stable softmax over keys.
        m = jnp.max(dots, axis=-1, keepdims=True)
        p = jnp.exp(dots - m)
        attn = p / jnp.sum(p, axis=-1, keepdims=True)
        # TODO(synk): attention dropout omitted (module default p=0.0 / eval mode).

        head_outs.append(jnp.dot(attn, v_h, preferred_element_type=jnp.float32))

    out = jnp.concatenate(head_outs, axis=-1)                 # (N, H*Dh)

    # --- Output projection (to_out Linear + bias) ---
    y = jnp.dot(out, wout_ref[...].astype(jnp.float32),
                preferred_element_type=jnp.float32)
    y = y + bout_ref[...].astype(jnp.float32)
    o_ref[...] = y.astype(o_ref.dtype)


def attention_vit(x, gamma, beta, w_qkv, w_out, b_out, *,
                  heads=8, dim_head=64, eps=1e-5):
    """AttentionVIT forward.  x: (B, N, D) -> (B, N, D)."""
    B, N, D = x.shape
    inner = heads * dim_head
    assert w_qkv.shape == (D, 3 * inner)
    assert w_out.shape == (inner, D)

    # Present 1-D params as lane-dense (1, D) slabs for clean VMEM layout.
    gamma2 = gamma.reshape(1, D)
    beta2 = beta.reshape(1, D)
    bout2 = b_out.reshape(1, D)

    kernel = functools.partial(
        _attention_vit_kernel,
        heads=heads, dim_head=dim_head,
        scale=float(dim_head) ** -0.5, eps=eps)

    # TODO(synk): for very long sequences (N >> 1024) tile queries/KV
    # flash-style with online softmax; full-sequence-per-batch fits VMEM for
    # typical ViT sequence lengths.
    return pl.pallas_call(
        kernel,
        out_shape=jax.ShapeDtypeStruct((B, N, D), x.dtype),
        grid_spec=pltpu.PrefetchScalarGridSpec(
            num_scalar_prefetch=0,
            grid=(B,),
            in_specs=[
                pl.BlockSpec((None, N, D), lambda b: (b, 0, 0)),        # x
                pl.BlockSpec((1, D), lambda b: (0, 0)),                 # LN gamma
                pl.BlockSpec((1, D), lambda b: (0, 0)),                 # LN beta
                pl.BlockSpec((D, 3 * inner), lambda b: (0, 0)),         # W_qkv
                pl.BlockSpec((inner, D), lambda b: (0, 0)),             # W_out
                pl.BlockSpec((1, D), lambda b: (0, 0)),                 # b_out
            ],
            out_specs=pl.BlockSpec((None, N, D), lambda b: (b, 0, 0)),
        ),
        compiler_params=pltpu.CompilerParams(
            dimension_semantics=("parallel",),      # megacore: batch across TCs
            vmem_limit_bytes=32 * 1024 * 1024,      # valid on v5e/v6e/v7x
        ),
    )(x, gamma2, beta2, w_qkv, w_out, bout2)


def _attention_vit_ref(x, gamma, beta, w_qkv, w_out, b_out, *,
                       heads=8, dim_head=64, eps=1e-5):
    """Pure-JAX reference matching the PyTorch module (eval / dropout=0)."""
    B, N, D = x.shape
    inner = heads * dim_head
    hp = lax.Precision.HIGHEST
    xf = x.astype(jnp.float32)
    mu = jnp.mean(xf, axis=-1, keepdims=True)
    var = jnp.mean(jnp.square(xf - mu), axis=-1, keepdims=True)
    xn = (xf - mu) / jnp.sqrt(var + eps) * gamma + beta
    qkv = jnp.dot(xn, w_qkv.astype(jnp.float32), precision=hp)
    q, k, v = jnp.split(qkv, 3, axis=-1)

    def to_heads(t):
        return t.reshape(B, N, heads, dim_head).transpose(0, 2, 1, 3)

    q, k, v = map(to_heads, (q, k, v))
    dots = jnp.einsum('bhnd,bhmd->bhnm', q, k, precision=hp) * (dim_head ** -0.5)
    attn = jax.nn.softmax(dots, axis=-1)
    out = jnp.einsum('bhnm,bhmd->bhnd', attn, v, precision=hp)
    out = out.transpose(0, 2, 1, 3).reshape(B, N, inner)
    y = jnp.dot(out, w_out.astype(jnp.float32), precision=hp) + b_out
    return y.astype(x.dtype)


if __name__ == "__main__":
    B, N, D = 2, 8, 32          # batch=2, seq=8, dim=32
    heads, dim_head = 8, 64     # module defaults -> inner_dim = 512
    inner = heads * dim_head

    key = jax.random.PRNGKey(0)
    kx, kq, ko, kb = jax.random.split(key, 4)
    x = jax.random.normal(kx, (B, N, D), dtype=jnp.float32)
    gamma = jnp.ones((D,), dtype=jnp.float32)
    beta = jnp.zeros((D,), dtype=jnp.float32)
    w_qkv = jax.random.normal(kq, (D, 3 * inner), dtype=jnp.float32) / jnp.sqrt(D)
    w_out = jax.random.normal(ko, (inner, D), dtype=jnp.float32) / jnp.sqrt(inner)
    b_out = jax.random.normal(kb, (D,), dtype=jnp.float32) * 0.02

    y = attention_vit(x, gamma, beta, w_qkv, w_out, b_out,
                      heads=heads, dim_head=dim_head)
    jax.block_until_ready(y)

    y_ref = _attention_vit_ref(x, gamma, beta, w_qkv, w_out, b_out,
                               heads=heads, dim_head=dim_head)
    assert y.shape == (B, N, D) and y.dtype == x.dtype
    max_err = float(jnp.max(jnp.abs(y - y_ref)))
    assert jnp.allclose(y, y_ref, atol=2e-3, rtol=2e-3), f"mismatch: {max_err}"

    print("KERNEL_OK")
</pallas_src>

<mosaic_0001>
module attributes {stable_mosaic.version = 11 : i64} {
  func.func @_attention_vit_kernel(%arg0: i32, %arg1: memref<1x8x32xf32, #tpu.memory_space<vmem>>, %arg2: memref<1x32xf32, #tpu.memory_space<vmem>>, %arg3: memref<1x32xf32, #tpu.memory_space<vmem>>, %arg4: memref<32x1536xf32, #tpu.memory_space<vmem>>, %arg5: memref<512x32xf32, #tpu.memory_space<vmem>>, %arg6: memref<1x32xf32, #tpu.memory_space<vmem>>, %arg7: memref<1x8x32xf32, #tpu.memory_space<vmem>>) attributes {dimension_semantics = [#tpu.dimension_semantics<parallel>], iteration_bounds = array<i64: 2>, scalar_prefetch = 0 : i64, scratch_operands = 0 : i64, tpu.core_type = #tpu.core_type<tc>, window_params = [{transform_indices = @transform_0, window_bounds = array<i64: 1, 8, 32>}, {pipeline_mode = #tpu.pipeline_mode<synchronous>, transform_indices = @transform_1, window_bounds = array<i64: 1, 32>}, {pipeline_mode = #tpu.pipeline_mode<synchronous>, transform_indices = @transform_2, window_bounds = array<i64: 1, 32>}, {pipeline_mode = #tpu.pipeline_mode<synchronous>, transform_indices = @transform_3, window_bounds = array<i64: 32, 1536>}, {pipeline_mode = #tpu.pipeline_mode<synchronous>, transform_indices = @transform_4, window_bounds = array<i64: 512, 32>}, {pipeline_mode = #tpu.pipeline_mode<synchronous>, transform_indices = @transform_5, window_bounds = array<i64: 1, 32>}, {transform_indices = @transform_6, window_bounds = array<i64: 1, 8, 32>}]} {
    %c0 = arith.constant 0 : index
    %c0_0 = arith.constant 0 : index
    %c0_1 = arith.constant 0 : index
    %0 = vector.load %arg1[%c0, %c0_0, %c0_1] : memref<1x8x32xf32, #tpu.memory_space<vmem>>, vector<1x8x32xf32>
    %1 = vector.shape_cast %0 : vector<1x8x32xf32> to vector<8x32xf32>
    %cst = arith.constant dense<0.000000e+00> : vector<8xf32>
    %2 = vector.multi_reduction <add>, %1, %cst [1] : vector<8x32xf32> to vector<8xf32>
    %3 = vector.shape_cast %2 : vector<8xf32> to vector<8x1xf32>
    %cst_2 = arith.constant 3.200000e+01 : f32
    %4 = vector.broadcast %cst_2 : f32 to vector<8x1xf32>
    %5 = arith.divf %3, %4 : vector<8x1xf32>
    %6 = vector.broadcast %5 : vector<8x1xf32> to vector<8x32xf32>
    %7 = arith.subf %1, %6 : vector<8x32xf32>
    %8 = arith.mulf %7, %7 : vector<8x32xf32>
    %cst_3 = arith.constant dense<0.000000e+00> : vector<8xf32>
    %9 = vector.multi_reduction <add>, %8, %cst_3 [1] : vector<8x32xf32> to vector<8xf32>
    %10 = vector.shape_cast %9 : vector<8xf32> to vector<8x1xf32>
    %cst_4 = arith.constant 3.200000e+01 : f32
    %11 = vector.broadcast %cst_4 : f32 to vector<8x1xf32>
    %12 = arith.divf %10, %11 : vector<8x1xf32>
    %13 = vector.broadcast %5 : vector<8x1xf32> to vector<8x32xf32>
    %14 = arith.subf %1, %13 : vector<8x32xf32>
    %cst_5 = arith.constant 9.99999974E-6 : f32
    %15 = vector.broadcast %cst_5 : f32 to vector<8x1xf32>
    %16 = arith.addf %12, %15 : vector<8x1xf32>
    %17 = math.rsqrt %16 : vector<8x1xf32>
    %18 = vector.broadcast %17 : vector<8x1xf32> to vector<8x32xf32>
    %19 = arith.mulf %14, %18 : vector<8x32xf32>
    %c0_6 = arith.constant 0 : index
    %c0_7 = arith.constant 0 : index
    %20 = vector.load %arg2[%c0_6, %c0_7] : memref<1x32xf32, #tpu.memory_space<vmem>>, vector<1x32xf32>
    %21 = vector.broadcast %20 : vector<1x32xf32> to vector<8x32xf32>
    %22 = arith.mulf %19, %21 : vector<8x32xf32>
    %c0_8 = arith.constant 0 : index
    %c0_9 = arith.constant 0 : index
    %23 = vector.load %arg3[%c0_8, %c0_9] : memref<1x32xf32, #tpu.memory_space<vmem>>, vector<1x32xf32>
    %24 = vector.broadcast %23 : vector<1x32xf32> to vector<8x32xf32>
    %25 = arith.addf %22, %24 : vector<8x32xf32>
    %c0_10 = arith.constant 0 : index
    %c0_11 = arith.constant 0 : index
    %26 = vector.load %arg4[%c0_10, %c0_11] : memref<32x1536xf32, #tpu.memory_space<vmem>>, vector<32x1536xf32>
    %cst_12 = arith.constant dense<0.000000e+00> : vector<8x1536xf32>
    %27 = tpu.matmul %25, %26, %cst_12 {dimension_numbers = #tpu.dot_dimension_numbers<[1], [0], [0], [1], [0, 0, 1, 1], [], []>} : vector<8x32xf32>, vector<32x1536xf32>, vector<8x1536xf32> -> vector<8x1536xf32>
    %28 = vector.extract_strided_slice %27 {offsets = [0, 0], sizes = [8, 64], strides = [1, 1]} : vector<8x1536xf32> to vector<8x64xf32>
    %29 = vector.extract_strided_slice %27 {offsets = [0, 512], sizes = [8, 64], strides = [1, 1]} : vector<8x1536xf32> to vector<8x64xf32>
    %30 = vector.extract_strided_slice %27 {offsets = [0, 1024], sizes = [8, 64], strides = [1, 1]} : vector<8x1536xf32> to vector<8x64xf32>
    %cst_13 = arith.constant dense<0.000000e+00> : vector<8x8xf32>
    %31 = tpu.matmul %28, %29, %cst_13 {dimension_numbers = #tpu.dot_dimension_numbers<[1], [1], [0], [0], [0, 0, 1, 0], [], []>} : vector<8x64xf32>, vector<8x64xf32>, vector<8x8xf32> -> vector<8x8xf32>
    %cst_14 = arith.constant 1.250000e-01 : f32
    %32 = vector.broadcast %cst_14 : f32 to vector<8x8xf32>
    %33 = arith.mulf %31, %32 : vector<8x8xf32>
    %cst_15 = arith.constant dense<0xFF800000> : vector<8xf32>
    %34 = vector.multi_reduction <maximumf>, %33, %cst_15 [1] : vector<8x8xf32> to vector<8xf32>
    %35 = vector.shape_cast %34 : vector<8xf32> to vector<8x1xf32>
    %36 = vector.broadcast %35 : vector<8x1xf32> to vector<8x8xf32>
    %37 = arith.subf %33, %36 : vector<8x8xf32>
    %38 = math.exp %37 : vector<8x8xf32>
    %cst_16 = arith.constant dense<0.000000e+00> : vector<8xf32>
    %39 = vector.multi_reduction <add>, %38, %cst_16 [1] : vector<8x8xf32> to vector<8xf32>
    %40 = vector.shape_cast %39 : vector<8xf32> to vector<8x1xf32>
    %41 = vector.broadcast %40 : vector<8x1xf32> to vector<8x8xf32>
    %42 = arith.divf %38, %41 : vector<8x8xf32>
    %cst_17 = arith.constant dense<0.000000e+00> : vector<8x64xf32>
    %43 = tpu.matmul %42, %30, %cst_17 {dimension_numbers = #tpu.dot_dimension_numbers<[1], [0], [0], [1], [0, 0, 1, 1], [], []>} : vector<8x8xf32>, vector<8x64xf32>, vector<8x64xf32> -> vector<8x64xf32>
    %44 = vector.extract_strided_slice %27 {offsets = [0, 64], sizes = [8, 64], strides = [1, 1]} : vector<8x1536xf32> to vector<8x64xf32>
    %45 = vector.extract_strided_slice %27 {offsets = [0, 576], sizes = [8, 64], strides = [1, 1]} : vector<8x1536xf32> to vector<8x64xf32>
    %46 = vector.extract_strided_slice %27 {offsets = [0, 1088], sizes = [8, 64], strides = [1, 1]} : vector<8x1536xf32> to vector<8x64xf32>
    %cst_18 = arith.constant dense<0.000000e+00> : vector<8x8xf32>
    %47 = tpu.matmul %44, %45, %cst_18 {dimension_numbers = #tpu.dot_dimension_numbers<[1], [1], [0], [0], [0, 0, 1, 0], [], []>} : vector<8x64xf32>, vector<8x64xf32>, vector<8x8xf32> -> vector<8x8xf32>
    %cst_19 = arith.constant 1.250000e-01 : f32
    %48 = vector.broadcast %cst_19 : f32 to vector<8x8xf32>
    %49 = arith.mulf %47, %48 : vector<8x8xf32>
    %cst_20 = arith.constant dense<0xFF800000> : vector<8xf32>
    %50 = vector.multi_reduction <maximumf>, %49, %cst_20 [1] : vector<8x8xf32> to vector<8xf32>
    %51 = vector.shape_cast %50 : vector<8xf32> to vector<8x1xf32>
    %52 = vector.broadcast %51 : vector<8x1xf32> to vector<8x8xf32>
    %53 = arith.subf %49, %52 : vector<8x8xf32>
    %54 = math.exp %53 : vector<8x8xf32>
    %cst_21 = arith.constant dense<0.000000e+00> : vector<8xf32>
    %55 = vector.multi_reduction <add>, %54, %cst_21 [1] : vector<8x8xf32> to vector<8xf32>
    %56 = vector.shape_cast %55 : vector<8xf32> to vector<8x1xf32>
    %57 = vector.broadcast %56 : vector<8x1xf32> to vector<8x8xf32>
    %58 = arith.divf %54, %57 : vector<8x8xf32>
    %cst_22 = arith.constant dense<0.000000e+00> : vector<8x64xf32>
    %59 = tpu.matmul %58, %46, %cst_22 {dimension_numbers = #tpu.dot_dimension_numbers<[1], [0], [0], [1], [0, 0, 1, 1], [], []>} : vector<8x8xf32>, vector<8x64xf32>, vector<8x64xf32> -> vector<8x64xf32>
    %60 = vector.extract_strided_slice %27 {offsets = [0, 128], sizes = [8, 64], strides = [1, 1]} : vector<8x1536xf32> to vector<8x64xf32>
    %61 = vector.extract_strided_slice %27 {offsets = [0, 640], sizes = [8, 64], strides = [1, 1]} : vector<8x1536xf32> to vector<8x64xf32>
    %62 = vector.extract_strided_slice %27 {offsets = [0, 1152], sizes = [8, 64], strides = [1, 1]} : vector<8x1536xf32> to vector<8x64xf32>
    %cst_23 = arith.constant dense<0.000000e+00> : vector<8x8xf32>
    %63 = tpu.matmul %60, %61, %cst_23 {dimension_numbers = #tpu.dot_dimension_numbers<[1], [1], [0], [0], [0, 0, 1, 0], [], []>} : vector<8x64xf32>, vector<8x64xf32>, vector<8x8xf32> -> vector<8x8xf32>
    %cst_24 = arith.constant 1.250000e-01 : f32
    %64 = vector.broadcast %cst_24 : f32 to vector<8x8xf32>
    %65 = arith.mulf %63, %64 : vector<8x8xf32>
    %cst_25 = arith.constant dense<0xFF800000> : vector<8xf32>
    %66 = vector.multi_reduction <maximumf>, %65, %cst_25 [1] : vector<8x8xf32> to vector<8xf32>
    %67 = vector.shape_cast %66 : vector<8xf32> to vector<8x1xf32>
    %68 = vector.broadcast %67 : vector<8x1xf32> to vector<8x8xf32>
    %69 = arith.subf %65, %68 : vector<8x8xf32>
    %70 = math.exp %69 : vector<8x8xf32>
    %cst_26 = arith.constant dense<0.000000e+00> : vector<8xf32>
    %71 = vector.multi_reduction <add>, %70, %cst_26 [1] : vector<8x8xf32> to vector<8xf32>
    %72 = vector.shape_cast %71 : vector<8xf32> to vector<8x1xf32>
    %73 = vector.broadcast %72 : vector<8x1xf32> to vector<8x8xf32>
    %74 = arith.divf %70, %73 : vector<8x8xf32>
    %cst_27 = arith.constant dense<0.000000e+00> : vector<8x64xf32>
    %75 = tpu.matmul %74, %62, %cst_27 {dimension_numbers = #tpu.dot_dimension_numbers<[1], [0], [0], [1], [0, 0, 1, 1], [], []>} : vector<8x8xf32>, vector<8x64xf32>, vector<8x64xf32> -> vector<8x64xf32>
    %76 = vector.extract_strided_slice %27 {offsets = [0, 192], sizes = [8, 64], strides = [1, 1]} : vector<8x1536xf32> to vector<8x64xf32>
    %77 = vector.extract_strided_slice %27 {offsets = [0, 704], sizes = [8, 64], strides = [1, 1]} : vector<8x1536xf32> to vector<8x64xf32>
    %78 = vector.extract_strided_slice %27 {offsets = [0, 1216], sizes = [8, 64], strides = [1, 1]} : vector<8x1536xf32> to vector<8x64xf32>
    %cst_28 = arith.constant dense<0.000000e+00> : vector<8x8xf32>
    %79 = tpu.matmul %76, %77, %cst_28 {dimension_numbers = #tpu.dot_dimension_numbers<[1], [1], [0], [0], [0, 0, 1, 0], [], []>} : vector<8x64xf32>, vector<8x64xf32>, vector<8x8xf32> -> vector<8x8xf32>
    %cst_29 = arith.constant 1.250000e-01 : f32
    %80 = vector.broadcast %cst_29 : f32 to vector<8x8xf32>
    %81 = arith.mulf %79, %80 : vector<8x8xf32>
    %cst_30 = arith.constant dense<0xFF800000> : vector<8xf32>
    %82 = vector.multi_reduction <maximumf>, %81, %cst_30 [1] : vector<8x8xf32> to vector<8xf32>
    %83 = vector.shape_cast %82 : vector<8xf32> to vector<8x1xf32>
    %84 = vector.broadcast %83 : vector<8x1xf32> to vector<8x8xf32>
    %85 = arith.subf %81, %84 : vector<8x8xf32>
    %86 = math.exp %85 : vector<8x8xf32>
    %cst_31 = arith.constant dense<0.000000e+00> : vector<8xf32>
    %87 = vector.multi_reduction <add>, %86, %cst_31 [1] : vector<8x8xf32> to vector<8xf32>
    %88 = vector.shape_cast %87 : vector<8xf32> to vector<8x1xf32>
    %89 = vector.broadcast %88 : vector<8x1xf32> to vector<8x8xf32>
    %90 = arith.divf %86, %89 : vector<8x8xf32>
    %cst_32 = arith.constant dense<0.000000e+00> : vector<8x64xf32>
    %91 = tpu.matmul %90, %78, %cst_32 {dimension_numbers = #tpu.dot_dimension_numbers<[1], [0], [0], [1], [0, 0, 1, 1], [], []>} : vector<8x8xf32>, vector<8x64xf32>, vector<8x64xf32> -> vector<8x64xf32>
    %92 = vector.extract_strided_slice %27 {offsets = [0, 256], sizes = [8, 64], strides = [1, 1]} : vector<8x1536xf32> to vector<8x64xf32>
    %93 = vector.extract_strided_slice %27 {offsets = [0, 768], sizes = [8, 64], strides = [1, 1]} : vector<8x1536xf32> to vector<8x64xf32>
    %94 = vector.extract_strided_slice %27 {offsets = [0, 1280], sizes = [8, 64], strides = [1, 1]} : vector<8x1536xf32> to vector<8x64xf32>
    %cst_33 = arith.constant dense<0.000000e+00> : vector<8x8xf32>
    %95 = tpu.matmul %92, %93, %cst_33 {dimension_numbers = #tpu.dot_dimension_numbers<[1], [1], [0], [0], [0, 0, 1, 0], [], []>} : vector<8x64xf32>, vector<8x64xf32>, vector<8x8xf32> -> vector<8x8xf32>
    %cst_34 = arith.constant 1.250000e-01 : f32
    %96 = vector.broadcast %cst_34 : f32 to vector<8x8xf32>
    %97 = arith.mulf %95, %96 : vector<8x8xf32>
    %cst_35 = arith.constant dense<0xFF800000> : vector<8xf32>
    %98 = vector.multi_reduction <maximumf>, %97, %cst_35 [1] : vector<8x8xf32> to vector<8xf32>
    %99 = vector.shape_cast %98 : vector<8xf32> to vector<8x1xf32>
    %100 = vector.broadcast %99 : vector<8x1xf32> to vector<8x8xf32>
    %101 = arith.subf %97, %100 : vector<8x8xf32>
    %102 = math.exp %101 : vector<8x8xf32>
    %cst_36 = arith.constant dense<0.000000e+00> : vector<8xf32>
    %103 = vector.multi_reduction <add>, %102, %cst_36 [1] : vector<8x8xf32> to vector<8xf32>
    %104 = vector.shape_cast %103 : vector<8xf32> to vector<8x1xf32>
    %105 = vector.broadcast %104 : vector<8x1xf32> to vector<8x8xf32>
    %106 = arith.divf %102, %105 : vector<8x8xf32>
    %cst_37 = arith.constant dense<0.000000e+00> : vector<8x64xf32>
    %107 = tpu.matmul %106, %94, %cst_37 {dimension_numbers = #tpu.dot_dimension_numbers<[1], [0], [0], [1], [0, 0, 1, 1], [], []>} : vector<8x8xf32>, vector<8x64xf32>, vector<8x64xf32> -> vector<8x64xf32>
    %108 = vector.extract_strided_slice %27 {offsets = [0, 320], sizes = [8, 64], strides = [1, 1]} : vector<8x1536xf32> to vector<8x64xf32>
    %109 = vector.extract_strided_slice %27 {offsets = [0, 832], sizes = [8, 64], strides = [1, 1]} : vector<8x1536xf32> to vector<8x64xf32>
    %110 = vector.extract_strided_slice %27 {offsets = [0, 1344], sizes = [8, 64], strides = [1, 1]} : vector<8x1536xf32> to vector<8x64xf32>
    %cst_38 = arith.constant dense<0.000000e+00> : vector<8x8xf32>
    %111 = tpu.matmul %108, %109, %cst_38 {dimension_numbers = #tpu.dot_dimension_numbers<[1], [1], [0], [0], [0, 0, 1, 0], [], []>} : vector<8x64xf32>, vector<8x64xf32>, vector<8x8xf32> -> vector<8x8xf32>
    %cst_39 = arith.constant 1.250000e-01 : f32
    %112 = vector.broadcast %cst_39 : f32 to vector<8x8xf32>
    %113 = arith.mulf %111, %112 : vector<8x8xf32>
    %cst_40 = arith.constant dense<0xFF800000> : vector<8xf32>
    %114 = vector.multi_reduction <maximumf>, %113, %cst_40 [1] : vector<8x8xf32> to vector<8xf32>
    %115 = vector.shape_cast %114 : vector<8xf32> to vector<8x1xf32>
    %116 = vector.broadcast %115 : vector<8x1xf32> to vector<8x8xf32>
    %117 = arith.subf %113, %116 : vector<8x8xf32>
    %118 = math.exp %117 : vector<8x8xf32>
    %cst_41 = arith.constant dense<0.000000e+00> : vector<8xf32>
    %119 = vector.multi_reduction <add>, %118, %cst_41 [1] : vector<8x8xf32> to vector<8xf32>
    %120 = vector.shape_cast %119 : vector<8xf32> to vector<8x1xf32>
    %121 = vector.broadcast %120 : vector<8x1xf32> to vector<8x8xf32>
    %122 = arith.divf %118, %121 : vector<8x8xf32>
    %cst_42 = arith.constant dense<0.000000e+00> : vector<8x64xf32>
    %123 = tpu.matmul %122, %110, %cst_42 {dimension_numbers = #tpu.dot_dimension_numbers<[1], [0], [0], [1], [0, 0, 1, 1], [], []>} : vector<8x8xf32>, vector<8x64xf32>, vector<8x64xf32> -> vector<8x64xf32>
    %124 = vector.extract_strided_slice %27 {offsets = [0, 384], sizes = [8, 64], strides = [1, 1]} : vector<8x1536xf32> to vector<8x64xf32>
    %125 = vector.extract_strided_slice %27 {offsets = [0, 896], sizes = [8, 64], strides = [1, 1]} : vector<8x1536xf32> to vector<8x64xf32>
    %126 = vector.extract_strided_slice %27 {offsets = [0, 1408], sizes = [8, 64], strides = [1, 1]} : vector<8x1536xf32> to vector<8x64xf32>
    %cst_43 = arith.constant dense<0.000000e+00> : vector<8x8xf32>
    %127 = tpu.matmul %124, %125, %cst_43 {dimension_numbers = #tpu.dot_dimension_numbers<[1], [1], [0], [0], [0, 0, 1, 0], [], []>} : vector<8x64xf32>, vector<8x64xf32>, vector<8x8xf32> -> vector<8x8xf32>
    %cst_44 = arith.constant 1.250000e-01 : f32
    %128 = vector.broadcast %cst_44 : f32 to vector<8x8xf32>
    %129 = arith.mulf %127, %128 : vector<8x8xf32>
    %cst_45 = arith.constant dense<0xFF800000> : vector<8xf32>
    %130 = vector.multi_reduction <maximumf>, %129, %cst_45 [1] : vector<8x8xf32> to vector<8xf32>
    %131 = vector.shape_cast %130 : vector<8xf32> to vector<8x1xf32>
    %132 = vector.broadcast %131 : vector<8x1xf32> to vector<8x8xf32>
    %133 = arith.subf %129, %132 : vector<8x8xf32>
    %134 = math.exp %133 : vector<8x8xf32>
    %cst_46 = arith.constant dense<0.000000e+00> : vector<8xf32>
    %135 = vector.multi_reduction <add>, %134, %cst_46 [1] : vector<8x8xf32> to vector<8xf32>
    %136 = vector.shape_cast %135 : vector<8xf32> to vector<8x1xf32>
    %137 = vector.broadcast %136 : vector<8x1xf32> to vector<8x8xf32>
    %138 = arith.divf %134, %137 : vector<8x8xf32>
    %cst_47 = arith.constant dense<0.000000e+00> : vector<8x64xf32>
    %139 = tpu.matmul %138, %126, %cst_47 {dimension_numbers = #tpu.dot_dimension_numbers<[1], [0], [0], [1], [0, 0, 1, 1], [], []>} : vector<8x8xf32>, vector<8x64xf32>, vector<8x64xf32> -> vector<8x64xf32>
    %140 = vector.extract_strided_slice %27 {offsets = [0, 448], sizes = [8, 64], strides = [1, 1]} : vector<8x1536xf32> to vector<8x64xf32>
    %141 = vector.extract_strided_slice %27 {offsets = [0, 960], sizes = [8, 64], strides = [1, 1]} : vector<8x1536xf32> to vector<8x64xf32>
    %142 = vector.extract_strided_slice %27 {offsets = [0, 1472], sizes = [8, 64], strides = [1, 1]} : vector<8x1536xf32> to vector<8x64xf32>
    %cst_48 = arith.constant dense<0.000000e+00> : vector<8x8xf32>
    %143 = tpu.matmul %140, %141, %cst_48 {dimension_numbers = #tpu.dot_dimension_numbers<[1], [1], [0], [0], [0, 0, 1, 0], [], []>} : vector<8x64xf32>, vector<8x64xf32>, vector<8x8xf32> -> vector<8x8xf32>
    %cst_49 = arith.constant 1.250000e-01 : f32
    %144 = vector.broadcast %cst_49 : f32 to vector<8x8xf32>
    %145 = arith.mulf %143, %144 : vector<8x8xf32>
    %cst_50 = arith.constant dense<0xFF800000> : vector<8xf32>
    %146 = vector.multi_reduction <maximumf>, %145, %cst_50 [1] : vector<8x8xf32> to vector<8xf32>
    %147 = vector.shape_cast %146 : vector<8xf32> to vector<8x1xf32>
    %148 = vector.broadcast %147 : vector<8x1xf32> to vector<8x8xf32>
    %149 = arith.subf %145, %148 : vector<8x8xf32>
    %150 = math.exp %149 : vector<8x8xf32>
    %cst_51 = arith.constant dense<0.000000e+00> : vector<8xf32>
    %151 = vector.multi_reduction <add>, %150, %cst_51 [1] : vector<8x8xf32> to vector<8xf32>
    %152 = vector.shape_cast %151 : vector<8xf32> to vector<8x1xf32>
    %153 = vector.broadcast %152 : vector<8x1xf32> to vector<8x8xf32>
    %154 = arith.divf %150, %153 : vector<8x8xf32>
    %cst_52 = arith.constant dense<0.000000e+00> : vector<8x64xf32>
    %155 = tpu.matmul %154, %142, %cst_52 {dimension_numbers = #tpu.dot_dimension_numbers<[1], [0], [0], [1], [0, 0, 1, 1], [], []>} : vector<8x8xf32>, vector<8x64xf32>, vector<8x64xf32> -> vector<8x64xf32>
    %156 = tpu.concatenate %43, %59, %75, %91, %107, %123, %139, %155 in 1 : vector<8x64xf32>, vector<8x64xf32>, vector<8x64xf32>, vector<8x64xf32>, vector<8x64xf32>, vector<8x64xf32>, vector<8x64xf32>, vector<8x64xf32> -> vector<8x512xf32>
    %c0_53 = arith.constant 0 : index
    %c0_54 = arith.constant 0 : index
    %157 = vector.load %arg5[%c0_53, %c0_54] : memref<512x32xf32, #tpu.memory_space<vmem>>, vector<512x32xf32>
    %cst_55 = arith.constant dense<0.000000e+00> : vector<8x32xf32>
    %158 = tpu.matmul %156, %157, %cst_55 {dimension_numbers = #tpu.dot_dimension_numbers<[1], [0], [0], [1], [0, 0, 1, 1], [], []>} : vector<8x512xf32>, vector<512x32xf32>, vector<8x32xf32> -> vector<8x32xf32>
    %c0_56 = arith.constant 0 : index
    %c0_57 = arith.constant 0 : index
    %159 = vector.load %arg6[%c0_56, %c0_57] : memref<1x32xf32, #tpu.memory_space<vmem>>, vector<1x32xf32>
    %160 = vector.broadcast %159 : vector<1x32xf32> to vector<8x32xf32>
    %161 = arith.addf %158, %160 : vector<8x32xf32>
    %c0_58 = arith.constant 0 : index
    %c0_59 = arith.constant 0 : index
    %c0_60 = arith.constant 0 : index
    %162 = vector.load %arg7[%c0_58, %c0_59, %c0_60] : memref<1x8x32xf32, #tpu.memory_space<vmem>>, vector<1x8x32xf32>
    %163 = vector.shape_cast %162 : vector<1x8x32xf32> to vector<8x32xf32>
    %164 = vector.shape_cast %161 : vector<8x32xf32> to vector<1x8x32xf32>
    tpu.vector_store %arg7[%c0_58, %c0_59, %c0_60], %164 {strides = array<i32>} : memref<1x8x32xf32, #tpu.memory_space<vmem>>, vector<1x8x32xf32>,
    return
  }
  func.func @transform_0(%arg0: i32) -> (i32, i32, i32) {
    %c0_i32 = arith.constant 0 : i32
    %c0_i32_0 = arith.constant 0 : i32
    %c0_i32_1 = arith.constant 0 : i32
    return %arg0, %c0_i32, %c0_i32_0 : i32, i32, i32
  }
  func.func @transform_1(%arg0: i32) -> (i32, i32) {
    %c0_i32 = arith.constant 0 : i32
    %c0_i32_0 = arith.constant 0 : i32
    %c0_i32_1 = arith.constant 0 : i32
    return %c0_i32, %c0_i32_0 : i32, i32
  }
  func.func @transform_2(%arg0: i32) -> (i32, i32) {
    %c0_i32 = arith.constant 0 : i32
    %c0_i32_0 = arith.constant 0 : i32
    %c0_i32_1 = arith.constant 0 : i32
    return %c0_i32, %c0_i32_0 : i32, i32
  }
  func.func @transform_3(%arg0: i32) -> (i32, i32) {
    %c0_i32 = arith.constant 0 : i32
    %c0_i32_0 = arith.constant 0 : i32
    %c0_i32_1 = arith.constant 0 : i32
    return %c0_i32, %c0_i32_0 : i32, i32
  }
  func.func @transform_4(%arg0: i32) -> (i32, i32) {
    %c0_i32 = arith.constant 0 : i32
    %c0_i32_0 = arith.constant 0 : i32
    %c0_i32_1 = arith.constant 0 : i32
    return %c0_i32, %c0_i32_0 : i32, i32
  }
  func.func @transform_5(%arg0: i32) -> (i32, i32) {
    %c0_i32 = arith.constant 0 : i32
    %c0_i32_0 = arith.constant 0 : i32
    %c0_i32_1 = arith.constant 0 : i32
    return %c0_i32, %c0_i32_0 : i32, i32
  }
  func.func @transform_6(%arg0: i32) -> (i32, i32, i32) {
    %c0_i32 = arith.constant 0 : i32
    %c0_i32_0 = arith.constant 0 : i32
    %c0_i32_1 = arith.constant 0 : i32
    return %arg0, %c0_i32, %c0_i32_0 : i32, i32, i32
  }
}

</mosaic_0001>

<llo_original>
// kernel: tpu_custom_call.1
$region0: #{tpu_custom_call.1}
  #allocation0 [shape = 'u32[]', space=smem, size = 0x4, offset = 0x4, fixed_abs, tag = 'smem constant byte address 0x4 - core index']
  #allocation1 [shape = 'u32[144,128]{1,0:T(1,128)}', space=vmem, size = 0x12000, scoped, tag = 'internal scratch']
  %s0 = inlined_call_operand.vmem [shape: f32[2,8,32], index: 0, kind: input, shape index: {}]
  %s1 = inlined_call_operand.vmem [shape: f32[1,32], index: 1, kind: input, shape index: {}]
  %s2 = inlined_call_operand.vmem [shape: f32[1,32], index: 2, kind: input, shape index: {}]
  %s3 = inlined_call_operand.vmem [shape: f32[32,1536], index: 3, kind: input, shape index: {}]
  %s4 = inlined_call_operand.vmem [shape: f32[512,32], index: 4, kind: input, shape index: {}]
  %s5 = inlined_call_operand.vmem [shape: f32[1,32], index: 5, kind: input, shape index: {}]
  %s6 = inlined_call_operand.hbm [shape: f32[2,8,32], index: 6, kind: output, shape index: {}]
  %s7 = sld [smem:[#allocation0]]
  $region57: #{tpu_custom_call.1} parent=0
    _
  %s9 = ssub.s32 1, %s7
  %s10 = scalar_select 0, %s9, %s7
  $region1: #{tpu_custom_call.1} parent=0
    #allocation2 [shape = 'u8[8192]{0}', space=vmem, size = 0x2000, scoped, tag = 'output window, operand 0']
    #allocation3 [shape = 's32[2]{0}', space=sflag, size = 0x8, scoped, tag = 'scoped memory for tpu_custom_call.1']
    %11 = vsyncpa [#allocation3], 0
    %s12 = scalar_lea.sflag [#allocation3], 1
    %13 = vsyncpa %s12, 0
    loop: start=0, step=1, limit=4
    $region2: #{tpu_custom_call.1} parent=1 // loop_pre_header
      _
    $region3: #{tpu_custom_call.1} parent=1 // loop_header
      %s15 = sphi 0, %s19
      %p16 = scmp.ge.s32.totalorder %s15, 4
      %s25 = sphi 0, %s27
      %s28 = sphi 0, %s25
      %s29 = sphi 0, %s28
      %s45 = sphi 0, %s29
      %s49 = sphi 0, %s49
      %s51 = sphi 0, %s49
      %s52 = sphi 0, %s51
      %s66 = sphi 0, %s52
      %s70 = sphi 0, %s70
      %s72 = sphi 0, %s70
      %s73 = sphi 0, %s72
      %s87 = sphi 0, %s73
      %s91 = sphi 0, %s91
      %s93 = sphi 0, %s91
      %s94 = sphi 0, %s93
      %s108 = sphi 0, %s94
      %s112 = sphi 0, %s112
      %s114 = sphi 0, %s112
      %s115 = sphi 0, %s114
      %s129 = sphi 0, %s115
      %s133 = sphi 0, %s133
      %s135 = sphi 0, %s133
      %s136 = sphi 0, %s135
      %s150 = sphi 0, %s136
      %s156 = sphi 0, %s158
      %s159 = sphi 0, %s156
      %s160 = sphi 0, %s159
      %s176 = sphi 0, %s160
    $region4: #{tpu_custom_call.1} parent=1 // loop_header_branch
      %18 = sbr.rel (%p16) target = $region8
    $region5: #{tpu_custom_call.1} parent=1 // loop_body
      %s20 = ssub.s32 %s15, 1
      %s21 = ssub.s32 %s15, 2
      %s22 = sadd.s32 %s15, 1
      %s23 = ssub.s32 %s15, %s22
      %p24 = scmp.eq.s32.totalorder %s23, 0
      %s26 = sadd.s32 %s25, 1
      %s27 = scalar_select %p24, %s25, %s26
      %p30 = pneg %p24
      %p31 = scmp.eq.s32.totalorder %s15, 1
      %p32 = por %p30, %p31
      %p33 = scmp.ne.s32.totalorder %s25, %s28
      %p34 = scmp.eq.s32.totalorder %s15, 0
      %p35 = por %p33, %p34
      %p36 = scmp.ne.s32.totalorder %s25, %s28
      %p37 = scmp.eq.s32.totalorder %s20, 1
      %p38 = por %p36, %p37
      %p39 = scmp.ne.s32.totalorder %s28, %s29
      %p40 = scmp.eq.s32.totalorder %s20, 0
      %p41 = por %p39, %p40
      %p42 = scmp.ne.s32.totalorder %s28, %s29
      %p43 = scmp.eq.s32.totalorder %s21, 1
      %p44 = por %p42, %p43
      %p46 = scmp.ne.s32.totalorder %s29, %s45
      %p47 = scmp.eq.s32.totalorder %s21, 0
      %p48 = por %p46, %p47
      %s50 = sadd.s32 %s49, 1
      %p53 = scmp.eq.s32.totalorder %s15, 1
      %p54 = scmp.ne.s32.totalorder %s49, %s51
      %p55 = scmp.eq.s32.totalorder %s15, 0
      %p56 = por %p54, %p55
      %p57 = scmp.ne.s32.totalorder %s49, %s51
      %p58 = scmp.eq.s32.totalorder %s20, 1
      %p59 = por %p57, %p58
      %p60 = scmp.ne.s32.totalorder %s51, %s52
      %p61 = scmp.eq.s32.totalorder %s20, 0
      %p62 = por %p60, %p61
      %p63 = scmp.ne.s32.totalorder %s51, %s52
      %p64 = scmp.eq.s32.totalorder %s21, 1
      %p65 = por %p63, %p64
      %p67 = scmp.ne.s32.totalorder %s52, %s66
      %p68 = scmp.eq.s32.totalorder %s21, 0
      %p69 = por %p67, %p68
      %s71 = sadd.s32 %s70, 1
      %p74 = scmp.eq.s32.totalorder %s15, 1
      %p75 = scmp.ne.s32.totalorder %s70, %s72
      %p76 = scmp.eq.s32.totalorder %s15, 0
      %p77 = por %p75, %p76
      %p78 = scmp.ne.s32.totalorder %s70, %s72
      %p79 = scmp.eq.s32.totalorder %s20, 1
      %p80 = por %p78, %p79
      %p81 = scmp.ne.s32.totalorder %s72, %s73
      %p82 = scmp.eq.s32.totalorder %s20, 0
      %p83 = por %p81, %p82
      %p84 = scmp.ne.s32.totalorder %s72, %s73
      %p85 = scmp.eq.s32.totalorder %s21, 1
      %p86 = por %p84, %p85
      %p88 = scmp.ne.s32.totalorder %s73, %s87
      %p89 = scmp.eq.s32.totalorder %s21, 0
      %p90 = por %p88, %p89
      %s92 = sadd.s32 %s91, 1
      %p95 = scmp.eq.s32.totalorder %s15, 1
      %p96 = scmp.ne.s32.totalorder %s91, %s93
      %p97 = scmp.eq.s32.totalorder %s15, 0
      %p98 = por %p96, %p97
      %p99 = scmp.ne.s32.totalorder %s91, %s93
      %p100 = scmp.eq.s32.totalorder %s20, 1
      %p101 = por %p99, %p100
      %p102 = scmp.ne.s32.totalorder %s93, %s94
      %p103 = scmp.eq.s32.totalorder %s20, 0
      %p104 = por %p102, %p103
      %p105 = scmp.ne.s32.totalorder %s93, %s94
      %p106 = scmp.eq.s32.totalorder %s21, 1
      %p107 = por %p105, %p106
      %p109 = scmp.ne.s32.totalorder %s94, %s108
      %p110 = scmp.eq.s32.totalorder %s21, 0
      %p111 = por %p109, %p110
      %s113 = sadd.s32 %s112, 1
      %p116 = scmp.eq.s32.totalorder %s15, 1
      %p117 = scmp.ne.s32.totalorder %s112, %s114
      %p118 = scmp.eq.s32.totalorder %s15, 0
      %p119 = por %p117, %p118
      %p120 = scmp.ne.s32.totalorder %s112, %s114
      %p121 = scmp.eq.s32.totalorder %s20, 1
      %p122 = por %p120, %p121
      %p123 = scmp.ne.s32.totalorder %s114, %s115
      %p124 = scmp.eq.s32.totalorder %s20, 0
      %p125 = por %p123, %p124
      %p126 = scmp.ne.s32.totalorder %s114, %s115
      %p127 = scmp.eq.s32.totalorder %s21, 1
      %p128 = por %p126, %p127
      %p130 = scmp.ne.s32.totalorder %s115, %s129
      %p131 = scmp.eq.s32.totalorder %s21, 0
      %p132 = por %p130, %p131
      %s134 = sadd.s32 %s133, 1
      %p137 = scmp.eq.s32.totalorder %s15, 1
      %p138 = scmp.ne.s32.totalorder %s133, %s135
      %p139 = scmp.eq.s32.totalorder %s15, 0
      %p140 = por %p138, %p139
      %p141 = scmp.ne.s32.totalorder %s133, %s135
      %p142 = scmp.eq.s32.totalorder %s20, 1
      %p143 = por %p141, %p142
      %p144 = scmp.ne.s32.totalorder %s135, %s136
      %p145 = scmp.eq.s32.totalorder %s20, 0
      %p146 = por %p144, %p145
      %p147 = scmp.ne.s32.totalorder %s135, %s136
      %p148 = scmp.eq.s32.totalorder %s21, 1
      %p149 = por %p147, %p148
      %p151 = scmp.ne.s32.totalorder %s136, %s150
      %p152 = scmp.eq.s32.totalorder %s21, 0
      %p153 = por %p151, %p152
      %s154 = ssub.s32 %s15, %s22
      %p155 = scmp.eq.s32.totalorder %s154, 0
      %s157 = sadd.s32 %s156, 1
      %s158 = scalar_select %p155, %s156, %s157
      %p161 = pneg %p155
      %p162 = scmp.eq.s32.totalorder %s15, 1
      %p163 = por %p161, %p162
      %p164 = scmp.ne.s32.totalorder %s156, %s159
      %p165 = scmp.eq.s32.totalorder %s15, 0
      %p166 = por %p164, %p165
      %p167 = scmp.ne.s32.totalorder %s156, %s159
      %p168 = scmp.eq.s32.totalorder %s20, 1
      %p169 = por %p167, %p168
      %p170 = scmp.ne.s32.totalorder %s159, %s160
      %p171 = scmp.eq.s32.totalorder %s20, 0
      %p172 = por %p170, %p171
      %p173 = scmp.ne.s32.totalorder %s159, %s160
      %p174 = scmp.eq.s32.totalorder %s21, 1
      %p175 = por %p173, %p174
      %p177 = scmp.ne.s32.totalorder %s160, %s176
      %p178 = scmp.eq.s32.totalorder %s21, 0
      %p179 = por %p177, %p178
      %p180 = scmp.le.s32.totalorder 1, %s15
      %p181 = scmp.lt.s32.totalorder %s15, 3
      %p182 = pnand %p180, %p181
      %p183 = pneg %p182
      // Predicated region
      $region9: #{tpu_custom_call.1} parent=5 // pred_check
        _
      $region10: #{tpu_custom_call.1} parent=5 // pred_check_branch
        %185 = sbr.rel (%p182) target = $region12
      $region11: #{tpu_custom_call.1} parent=5 // pred_region
        %s186 = ssub.s32 %s15, 1
        // Predicated region
        $region13: #{tpu_custom_call.1} parent=11 // pred_check
          %p187 = pneg %p62
        $region14: #{tpu_custom_call.1} parent=11 // pred_check_branch
          %189 = sbr.rel (%p187) target = $region16
        $region15: #{tpu_custom_call.1} parent=11 // pred_region
          _
        $region16: #{tpu_custom_call.1} parent=11 // pred_fallthru
          _
        // Predicated region
        $region17: #{tpu_custom_call.1} parent=11 // pred_check
          %p190 = pneg %p83
        $region18: #{tpu_custom_call.1} parent=11 // pred_check_branch
          %192 = sbr.rel (%p190) target = $region20
        $region19: #{tpu_custom_call.1} parent=11 // pred_region
          _
        $region20: #{tpu_custom_call.1} parent=11 // pred_fallthru
          _
        // Predicated region
        $region21: #{tpu_custom_call.1} parent=11 // pred_check
          %p193 = pneg %p104
        $region22: #{tpu_custom_call.1} parent=11 // pred_check_branch
          %195 = sbr.rel (%p193) target = $region24
        $region23: #{tpu_custom_call.1} parent=11 // pred_region
          _
        $region24: #{tpu_custom_call.1} parent=11 // pred_fallthru
          _
        // Predicated region
        $region25: #{tpu_custom_call.1} parent=11 // pred_check
          %p196 = pneg %p125
        $region26: #{tpu_custom_call.1} parent=11 // pred_check_branch
          %198 = sbr.rel (%p196) target = $region28
        $region27: #{tpu_custom_call.1} parent=11 // pred_region
          _
        $region28: #{tpu_custom_call.1} parent=11 // pred_fallthru
          _
        // Predicated region
        $region29: #{tpu_custom_call.1} parent=11 // pred_check
          %p199 = pneg %p146
        $region30: #{tpu_custom_call.1} parent=11 // pred_check_branch
          %201 = sbr.rel (%p199) target = $region32
        $region31: #{tpu_custom_call.1} parent=11 // pred_region
          _
        $region32: #{tpu_custom_call.1} parent=11 // pred_fallthru
          _
      $region12: #{tpu_custom_call.1} parent=5 // pred_fallthru
        _
      %p202 = scmp.lt.s32.totalorder %s15, 2
      // Predicated region
      $region33: #{tpu_custom_call.1} parent=5 // pred_check
        %p203 = pneg %p202
      $region34: #{tpu_custom_call.1} parent=5 // pred_check_branch
        %205 = sbr.rel (%p203) target = $region36
      $region35: #{tpu_custom_call.1} parent=5 // pred_region
        // Predicated region
        $region37: #{tpu_custom_call.1} parent=35 // pred_check
          %p206 = pneg %p35
        $region38: #{tpu_custom_call.1} parent=35 // pred_check_branch
          %208 = sbr.rel (%p206) target = $region40
        $region39: #{tpu_custom_call.1} parent=35 // pred_region
          %p209 = scmp.lt.s32.totalorder %s15, 1
          %s210 = scalar_select %p209, %s15, 1
          %s211 = smul.addr %s210, 8
          %s212 = scalar_lea.vmem %s0, %s211
        $region40: #{tpu_custom_call.1} parent=35 // pred_fallthru
          _
      $region36: #{tpu_custom_call.1} parent=5 // pred_fallthru
        _
      %p213 = scmp.le.s32.totalorder 1, %s15
      %p214 = scmp.lt.s32.totalorder %s15, 3
      %p215 = pnand %p213, %p214
      %p216 = pneg %p215
      // Predicated region
      $region41: #{tpu_custom_call.1} parent=5 // pred_check
        _
      $region42: #{tpu_custom_call.1} parent=5 // pred_check_branch
        %218 = sbr.rel (%p215) target = $region44
      $region43: #{tpu_custom_call.1} parent=5 // pred_region
        %s219 = ssub.s32 %s15, 1
        %p220 = scmp.lt.s32.totalorder %s20, 1
        %s221 = scalar_select %p220, %s20, 1
        %s222 = smul.addr %s221, 8
        %s223 = scalar_lea.vmem %s0, %s222
        %p224 = pneg %p41
        %p225 = pneg %p38
        %p226 = pneg %p62
        %p227 = pneg %p59
        %p228 = pneg %p83
        %p229 = pneg %p80
        %p230 = pneg %p104
        %p231 = pneg %p101
        %p232 = pneg %p125
        %p233 = pneg %p122
        %p234 = pneg %p146
        %p235 = pneg %p143
        %p236 = pneg %p172
        %p237 = pneg %p169
        %s238 = sand.u32 %s159, 1
        %s239 = scalar_lea.sflag [#allocation3], %s238
        %s240 = sand.u32 %s159, 1
        %s241 = smul.addr %s240, 8
        %s242 = scalar_lea.vmem [#allocation2], %s241
        %p243 = scmp.lt.s32.totalorder %s20, 1
        %s244 = scalar_select %p243, %s20, 1
        %s245 = smul.addr %s244, 8
        %s246 = scalar_lea.vmem %s0, %s245
        %v247 = vld [vmem:[%s246] sm:$0xff]
        %vm248 = vcmask 261120
        %v249 = vsel %vm248, %v247, 0.0
        %250 = vadd.xlane.f32.xlu0 %v249
        %v251 = vpop.xlane.xlu0 %250
        %v252 = vrcp.pop 32.0
        %v253 = vmul.f32 %v251, %v252
        %v254 = vsub.f32 %v247, %v253
        %v255 = vmul.f32 %v254, %v254
        %v256 = vsel %vm248, %v255, 0.0
        %257 = vadd.xlane.f32.xlu0 %v256
        %v258 = vpop.xlane.xlu0 %257
        %v259 = vmul.f32 %v258, %v252
        %v260 = vadd.f32 %v259, 1e-05
        %v261 = vrsqrt.pop %v260
        %v262 = vmul.f32 %v254, %v261
        %v263 = vld [vmem:[%s1] sm:$0x1]
        %v265 = vlaneseq
        %v266 = vshrl.u32 %v265, 7
        %v267 = vsub.s32 0, %v266
        %v268 = vrot.slane %v263, %v267
        %v270 = vmul.f32 %v262, %v268
        %v271 = vld [vmem:[%s2] sm:$0x1]
        %v273 = vlaneseq
        %v274 = vshrl.u32 %v273, 7
        %v275 = vsub.s32 0, %v274
        %v276 = vrot.slane %v271, %v275
        %v278 = vadd.f32 %v270, %v276
        %v279 = vld [vmem:[%s3] sm:$0xff]
        %v280 = vld [vmem:[%s3 + $0x8] sm:$0xff]
        %v281 = vld [vmem:[%s3 + $0x10] sm:$0xff]
        %v282 = vld [vmem:[%s3 + $0x18] sm:$0xff]
        %v283 = vld [vmem:[%s3 + $0x20] sm:$0xff]
        %v284 = vld [vmem:[%s3 + $0x28] sm:$0xff]
        %v285 = vld [vmem:[%s3 + $0x30] sm:$0xff]
        %v286 = vld [vmem:[%s3 + $0x38] sm:$0xff]
        %v287 = vld [vmem:[%s3 + $0x40] sm:$0xff]
        %v288 = vld [vmem:[%s3 + $0x48] sm:$0xff]
        %v289 = vld [vmem:[%s3 + $0x50] sm:$0xff]
        %v290 = vld [vmem:[%s3 + $0x58] sm:$0xff]
        %v291 = vld [vmem:[%s3 + $0x60] sm:$0xff]
        %v292 = vld [vmem:[%s3 + $0x68] sm:$0xff]
        %v293 = vld [vmem:[%s3 + $0x70] sm:$0xff]
        %v294 = vld [vmem:[%s3 + $0x78] sm:$0xff]
        %v295 = vld [vmem:[%s3 + $0x80] sm:$0xff]
        %v296 = vld [vmem:[%s3 + $0x88] sm:$0xff]
        %v297 = vld [vmem:[%s3 + $0x90] sm:$0xff]
        %v298 = vld [vmem:[%s3 + $0x98] sm:$0xff]
        %v299 = vld [vmem:[%s3 + $0xa0] sm:$0xff]
        %v300 = vld [vmem:[%s3 + $0xa8] sm:$0xff]
        %v301 = vld [vmem:[%s3 + $0xb0] sm:$0xff]
        %v302 = vld [vmem:[%s3 + $0xb8] sm:$0xff]
        %v303 = vld [vmem:[%s3 + $0xc0] sm:$0xff]
        %v304 = vld [vmem:[%s3 + $0xc8] sm:$0xff]
        %v305 = vld [vmem:[%s3 + $0xd0] sm:$0xff]
        %v306 = vld [vmem:[%s3 + $0xd8] sm:$0xff]
        %v307 = vld [vmem:[%s3 + $0xe0] sm:$0xff]
        %v308 = vld [vmem:[%s3 + $0xe8] sm:$0xff]
        %v309 = vld [vmem:[%s3 + $0xf0] sm:$0xff]
        %v310 = vld [vmem:[%s3 + $0xf8] sm:$0xff]
        %v311 = vld [vmem:[%s3 + $0x100] sm:$0xff]
        %v312 = vld [vmem:[%s3 + $0x108] sm:$0xff]
        %v313 = vld [vmem:[%s3 + $0x110] sm:$0xff]
        %v314 = vld [vmem:[%s3 + $0x118] sm:$0xff]
        %v315 = vld [vmem:[%s3 + $0x120] sm:$0xff]
        %v316 = vld [vmem:[%s3 + $0x128] sm:$0xff]
        %v317 = vld [vmem:[%s3 + $0x130] sm:$0xff]
        %v318 = vld [vmem:[%s3 + $0x138] sm:$0xff]
        %v319 = vld [vmem:[%s3 + $0x140] sm:$0xff]
        %v320 = vld [vmem:[%s3 + $0x148] sm:$0xff]
        %v321 = vld [vmem:[%s3 + $0x150] sm:$0xff]
        %v322 = vld [vmem:[%s3 + $0x158] sm:$0xff]
        %v323 = vld [vmem:[%s3 + $0x160] sm:$0xff]
        %v324 = vld [vmem:[%s3 + $0x168] sm:$0xff]
        %v325 = vld [vmem:[%s3 + $0x170] sm:$0xff]
        %v326 = vld [vmem:[%s3 + $0x178] sm:$0xff]
        %v328 = vsel %vm248, %v278, 0
        %330 = vmatprep.subr.mxu0 %v280
        %331 = vmatpush1.msra.mxu0 %v279
        %332 = vmatprep.subr.mxu0 %v292
        %333 = vmatpush1.msra.mxu0 %v291
        %334 = vmatprep.subr.mxu0 %v304
        %335 = vmatpush1.msra.mxu0 %v303
        %336 = vmatprep.subr.mxu0 %v316
        %337 = vmatpush1.msra.mxu0 %v315
        %338 = vmatprep.subr.mxu0 0.0
        %339 = vmatpush1.msra.mxu0 0.0
        %340 = vmatprep.subr.mxu0 0.0
        %341 = vmatpush1.msra.mxu0 0.0
        %342 = vmatprep.subr.mxu0 0.0
        %343 = vmatpush1.msra.mxu0 0.0
        %344 = vmatprep.subr.mxu0 0.0
        %345 = vmatpush1.msra.mxu0 0.0
        %346 = vmatprep.subr.mxu0 0.0
        %347 = vmatpush1.msra.mxu0 0.0
        %348 = vmatprep.subr.mxu0 0.0
        %349 = vmatpush1.msra.mxu0 0.0
        %350 = vmatprep.subr.mxu0 0.0
        %351 = vmatpush1.msra.mxu0 0.0
        %352 = vmatprep.subr.mxu0 0.0
        %353 = vmatpush1.msra.mxu0 0.0
        %354 = vmatprep.subr.mxu0 0.0
        %355 = vmatpush1.msra.mxu0 0.0
        %356 = vmatprep.subr.mxu0 0.0
        %357 = vmatpush1.msra.mxu0 0.0
        %358 = vmatprep.subr.mxu0 0.0
        %359 = vmatpush1.msra.mxu0 0.0
        %360 = vmatprep.subr.mxu0 0.0
        %361 = vmatpush1.msra.mxu0 0.0
        %362 = vmatprep.subr.mxu0 0.0
        %363 = vmatpush1.msra.mxu0 0.0
        %364 = vmatprep.subr.mxu0 0.0
        %365 = vmatpush1.msra.mxu0 0.0
        %366 = vmatprep.subr.mxu0 0.0
        %367 = vmatpush1.msra.mxu0 0.0
        %368 = vmatprep.subr.mxu0 0.0
        %369 = vmatpush1.msra.mxu0 0.0
        %370 = vmatprep.subr.mxu0 0.0
        %371 = vmatpush1.msra.mxu0 0.0
        %372 = vmatprep.subr.mxu0 0.0
        %373 = vmatpush1.msra.mxu0 0.0
        %374 = vmatprep.subr.mxu0 0.0
        %375 = vmatpush1.msra.mxu0 0.0
        %376 = vmatprep.subr.mxu0 0.0
        %377 = vmatpush1.msra.mxu0 0.0
        %378 = vmatprep.subr.mxu0 0.0
        %379 = vmatpush1.msra.mxu0 0.0
        %380 = vmatprep.subr.mxu0 0.0
        %381 = vmatpush1.msra.mxu0 0.0
        %382 = vmatprep.subr.mxu0 0.0
        %383 = vmatpush1.msra.mxu0 0.0
        %384 = vmatprep.subr.mxu0 0.0
        %385 = vmatpush1.msra.mxu0 0.0
        %386 = vmatprep.subr.mxu0 0.0
        %387 = vmatpush1.msra.mxu0 0.0
        %388 = vmatprep.subr.mxu0 0.0
        %389 = vmatpush1.msra.mxu0 0.0
        %390 = vmatprep.subr.mxu0 0.0
        %391 = vmatpush1.msra.mxu0 0.0
        %392 = vmatprep.subr.mxu0 0.0
        %393 = vmatpush1.msra.mxu0 0.0
        %394 = vmatprep.mubr.f32.mxu0 0.0
        %395 = vmatmul.mubr.f32.gmra.mrb[0].mxu0 %v328
        %v396 = vpop.f32.mrb[0].mxu0
        %v397 = vadd.f32 0.0, %v396
        %v398 = vpop.f32.mrb[0].mxu0
        %v399 = vadd.f32 0.0, %v398
        %400 = vdwg.mxu0
        %401 = vmatprep.subr.mxu0 %v282
        %402 = vmatpush1.msra.mxu0 %v281
        %403 = vmatprep.subr.mxu0 %v294
        %404 = vmatpush1.msra.mxu0 %v293
        %405 = vmatprep.subr.mxu0 %v306
        %406 = vmatpush1.msra.mxu0 %v305
        %407 = vmatprep.subr.mxu0 %v318
        %408 = vmatpush1.msra.mxu0 %v317
        %409 = vmatprep.subr.mxu0 0.0
        %410 = vmatpush1.msra.mxu0 0.0
        %411 = vmatprep.subr.mxu0 0.0
        %412 = vmatpush1.msra.mxu0 0.0
        %413 = vmatprep.subr.mxu0 0.0
        %414 = vmatpush1.msra.mxu0 0.0
        %415 = vmatprep.subr.mxu0 0.0
        %416 = vmatpush1.msra.mxu0 0.0
        %417 = vmatprep.subr.mxu0 0.0
        %418 = vmatpush1.msra.mxu0 0.0
        %419 = vmatprep.subr.mxu0 0.0
        %420 = vmatpush1.msra.mxu0 0.0
        %421 = vmatprep.subr.mxu0 0.0
        %422 = vmatpush1.msra.mxu0 0.0
        %423 = vmatprep.subr.mxu0 0.0
        %424 = vmatpush1.msra.mxu0 0.0
        %425 = vmatprep.subr.mxu0 0.0
        %426 = vmatpush1.msra.mxu0 0.0
        %427 = vmatprep.subr.mxu0 0.0
        %428 = vmatpush1.msra.mxu0 0.0
        %429 = vmatprep.subr.mxu0 0.0
        %430 = vmatpush1.msra.mxu0 0.0
        %431 = vmatprep.subr.mxu0 0.0
        %432 = vmatpush1.msra.mxu0 0.0
        %433 = vmatprep.subr.mxu0 0.0
        %434 = vmatpush1.msra.mxu0 0.0
        %435 = vmatprep.subr.mxu0 0.0
        %436 = vmatpush1.msra.mxu0 0.0
        %437 = vmatprep.subr.mxu0 0.0
        %438 = vmatpush1.msra.mxu0 0.0
        %439 = vmatprep.subr.mxu0 0.0
        %440 = vmatpush1.msra.mxu0 0.0
        %441 = vmatprep.subr.mxu0 0.0
        %442 = vmatpush1.msra.mxu0 0.0
        %443 = vmatprep.subr.mxu0 0.0
        %444 = vmatpush1.msra.mxu0 0.0
        %445 = vmatprep.subr.mxu0 0.0
        %446 = vmatpush1.msra.mxu0 0.0
        %447 = vmatprep.subr.mxu0 0.0
        %448 = vmatpush1.msra.mxu0 0.0
        %449 = vmatprep.subr.mxu0 0.0
        %450 = vmatpush1.msra.mxu0 0.0
        %451 = vmatprep.subr.mxu0 0.0
        %452 = vmatpush1.msra.mxu0 0.0
        %453 = vmatprep.subr.mxu0 0.0
        %454 = vmatpush1.msra.mxu0 0.0
        %455 = vmatprep.subr.mxu0 0.0
        %456 = vmatpush1.msra.mxu0 0.0
        %457 = vmatprep.subr.mxu0 0.0
        %458 = vmatpush1.msra.mxu0 0.0
        %459 = vmatprep.subr.mxu0 0.0
        %460 = vmatpush1.msra.mxu0 0.0
        %461 = vmatprep.subr.mxu0 0.0
        %462 = vmatpush1.msra.mxu0 0.0
        %463 = vmatprep.subr.mxu0 0.0
        %464 = vmatpush1.msra.mxu0 0.0
        %465 = vmatprep.mubr.f32.mxu0 0.0
        %466 = vmatmul.mubr.f32.gmra.mrb[0].mxu0 %v328
        %v467 = vpop.f32.mrb[0].mxu0
        %v468 = vadd.f32 0.0, %v467
        %v469 = vpop.f32.mrb[0].mxu0
        %v470 = vadd.f32 0.0, %v469
        %471 = vdwg.mxu0
        %472 = vmatprep.subr.mxu0 %v284
        %473 = vmatpush1.msra.mxu0 %v283
        %474 = vmatprep.subr.mxu0 %v296
        %475 = vmatpush1.msra.mxu0 %v295
        %476 = vmatprep.subr.mxu0 %v308
        %477 = vmatpush1.msra.mxu0 %v307
        %478 = vmatprep.subr.mxu0 %v320
        %479 = vmatpush1.msra.mxu0 %v319
        %480 = vmatprep.subr.mxu0 0.0
        %481 = vmatpush1.msra.mxu0 0.0
        %482 = vmatprep.subr.mxu0 0.0
        %483 = vmatpush1.msra.mxu0 0.0
        %484 = vmatprep.subr.mxu0 0.0
        %485 = vmatpush1.msra.mxu0 0.0
        %486 = vmatprep.subr.mxu0 0.0
        %487 = vmatpush1.msra.mxu0 0.0
        %488 = vmatprep.subr.mxu0 0.0
        %489 = vmatpush1.msra.mxu0 0.0
        %490 = vmatprep.subr.mxu0 0.0
        %491 = vmatpush1.msra.mxu0 0.0
        %492 = vmatprep.subr.mxu0 0.0
        %493 = vmatpush1.msra.mxu0 0.0
        %494 = vmatprep.subr.mxu0 0.0
        %495 = vmatpush1.msra.mxu0 0.0
        %496 = vmatprep.subr.mxu0 0.0
        %497 = vmatpush1.msra.mxu0 0.0
        %498 = vmatprep.subr.mxu0 0.0
        %499 = vmatpush1.msra.mxu0 0.0
        %500 = vmatprep.subr.mxu0 0.0
        %501 = vmatpush1.msra.mxu0 0.0
        %502 = vmatprep.subr.mxu0 0.0
        %503 = vmatpush1.msra.mxu0 0.0
        %504 = vmatprep.subr.mxu0 0.0
        %505 = vmatpush1.msra.mxu0 0.0
        %506 = vmatprep.subr.mxu0 0.0
        %507 = vmatpush1.msra.mxu0 0.0
        %508 = vmatprep.subr.mxu0 0.0
        %509 = vmatpush1.msra.mxu0 0.0
        %510 = vmatprep.subr.mxu0 0.0
        %511 = vmatpush1.msra.mxu0 0.0
        %512 = vmatprep.subr.mxu0 0.0
        %513 = vmatpush1.msra.mxu0 0.0
        %514 = vmatprep.subr.mxu0 0.0
        %515 = vmatpush1.msra.mxu0 0.0
        %516 = vmatprep.subr.mxu0 0.0
        %517 = vmatpush1.msra.mxu0 0.0
        %518 = vmatprep.subr.mxu0 0.0
        %519 = vmatpush1.msra.mxu0 0.0
        %520 = vmatprep.subr.mxu0 0.0
        %521 = vmatpush1.msra.mxu0 0.0
        %522 = vmatprep.subr.mxu0 0.0
        %523 = vmatpush1.msra.mxu0 0.0
        %524 = vmatprep.subr.mxu0 0.0
        %525 = vmatpush1.msra.mxu0 0.0
        %526 = vmatprep.subr.mxu0 0.0
        %527 = vmatpush1.msra.mxu0 0.0
        %528 = vmatprep.subr.mxu0 0.0
        %529 = vmatpush1.msra.mxu0 0.0
        %530 = vmatprep.subr.mxu0 0.0
        %531 = vmatpush1.msra.mxu0 0.0
        %532 = vmatprep.subr.mxu0 0.0
        %533 = vmatpush1.msra.mxu0 0.0
        %534 = vmatprep.subr.mxu0 0.0
        %535 = vmatpush1.msra.mxu0 0.0
        %536 = vmatprep.mubr.f32.mxu0 0.0
        %537 = vmatmul.mubr.f32.gmra.mrb[0].mxu0 %v328
        %v538 = vpop.f32.mrb[0].mxu0
        %v539 = vadd.f32 0.0, %v538
        %v540 = vpop.f32.mrb[0].mxu0
        %v541 = vadd.f32 0.0, %v540
        %542 = vdwg.mxu0
        %543 = vmatprep.subr.mxu0 %v286
        %544 = vmatpush1.msra.mxu0 %v285
        %545 = vmatprep.subr.mxu0 %v298
        %546 = vmatpush1.msra.mxu0 %v297
        %547 = vmatprep.subr.mxu0 %v310
        %548 = vmatpush1.msra.mxu0 %v309
        %549 = vmatprep.subr.mxu0 %v322
        %550 = vmatpush1.msra.mxu0 %v321
        %551 = vmatprep.subr.mxu0 0.0
        %552 = vmatpush1.msra.mxu0 0.0
        %553 = vmatprep.subr.mxu0 0.0
        %554 = vmatpush1.msra.mxu0 0.0
        %555 = vmatprep.subr.mxu0 0.0
        %556 = vmatpush1.msra.mxu0 0.0
        %557 = vmatprep.subr.mxu0 0.0
        %558 = vmatpush1.msra.mxu0 0.0
        %559 = vmatprep.subr.mxu0 0.0
        %560 = vmatpush1.msra.mxu0 0.0
        %561 = vmatprep.subr.mxu0 0.0
        %562 = vmatpush1.msra.mxu0 0.0
        %563 = vmatprep.subr.mxu0 0.0
        %564 = vmatpush1.msra.mxu0 0.0
        %565 = vmatprep.subr.mxu0 0.0
        %566 = vmatpush1.msra.mxu0 0.0
        %567 = vmatprep.subr.mxu0 0.0
        %568 = vmatpush1.msra.mxu0 0.0
        %569 = vmatprep.subr.mxu0 0.0
        %570 = vmatpush1.msra.mxu0 0.0
        %571 = vmatprep.subr.mxu0 0.0
        %572 = vmatpush1.msra.mxu0 0.0
        %573 = vmatprep.subr.mxu0 0.0
        %574 = vmatpush1.msra.mxu0 0.0
        %575 = vmatprep.subr.mxu0 0.0
        %576 = vmatpush1.msra.mxu0 0.0
        %577 = vmatprep.subr.mxu0 0.0
        %578 = vmatpush1.msra.mxu0 0.0
        %579 = vmatprep.subr.mxu0 0.0
        %580 = vmatpush1.msra.mxu0 0.0
        %581 = vmatprep.subr.mxu0 0.0
        %582 = vmatpush1.msra.mxu0 0.0
        %583 = vmatprep.subr.mxu0 0.0
        %584 = vmatpush1.msra.mxu0 0.0
        %585 = vmatprep.subr.mxu0 0.0
        %586 = vmatpush1.msra.mxu0 0.0
        %587 = vmatprep.subr.mxu0 0.0
        %588 = vmatpush1.msra.mxu0 0.0
        %589 = vmatprep.subr.mxu0 0.0
        %590 = vmatpush1.msra.mxu0 0.0
        %591 = vmatprep.subr.mxu0 0.0
        %592 = vmatpush1.msra.mxu0 0.0
        %593 = vmatprep.subr.mxu0 0.0
        %594 = vmatpush1.msra.mxu0 0.0
        %595 = vmatprep.subr.mxu0 0.0
        %596 = vmatpush1.msra.mxu0 0.0
        %597 = vmatprep.subr.mxu0 0.0
        %598 = vmatpush1.msra.mxu0 0.0
        %599 = vmatprep.subr.mxu0 0.0
        %600 = vmatpush1.msra.mxu0 0.0
        %601 = vmatprep.subr.mxu0 0.0
        %602 = vmatpush1.msra.mxu0 0.0
        %603 = vmatprep.subr.mxu0 0.0
        %604 = vmatpush1.msra.mxu0 0.0
        %605 = vmatprep.subr.mxu0 0.0
        %606 = vmatpush1.msra.mxu0 0.0
        %607 = vmatprep.mubr.f32.mxu0 0.0
        %608 = vmatmul.mubr.f32.gmra.mrb[0].mxu0 %v328
        %v609 = vpop.f32.mrb[0].mxu0
        %v610 = vadd.f32 0.0, %v609
        %v611 = vpop.f32.mrb[0].mxu0
        %v612 = vadd.f32 0.0, %v611
        %613 = vdwg.mxu0
        %614 = vmatprep.subr.mxu0 %v288
        %615 = vmatpush1.msra.mxu0 %v287
        %616 = vmatprep.subr.mxu0 %v300
        %617 = vmatpush1.msra.mxu0 %v299
        %618 = vmatprep.subr.mxu0 %v312
        %619 = vmatpush1.msra.mxu0 %v311
        %620 = vmatprep.subr.mxu0 %v324
        %621 = vmatpush1.msra.mxu0 %v323
        %622 = vmatprep.subr.mxu0 0.0
        %623 = vmatpush1.msra.mxu0 0.0
        %624 = vmatprep.subr.mxu0 0.0
        %625 = vmatpush1.msra.mxu0 0.0
        %626 = vmatprep.subr.mxu0 0.0
        %627 = vmatpush1.msra.mxu0 0.0
        %628 = vmatprep.subr.mxu0 0.0
        %629 = vmatpush1.msra.mxu0 0.0
        %630 = vmatprep.subr.mxu0 0.0
        %631 = vmatpush1.msra.mxu0 0.0
        %632 = vmatprep.subr.mxu0 0.0
        %633 = vmatpush1.msra.mxu0 0.0
        %634 = vmatprep.subr.mxu0 0.0
        %635 = vmatpush1.msra.mxu0 0.0
        %636 = vmatprep.subr.mxu0 0.0
        %637 = vmatpush1.msra.mxu0 0.0
        %638 = vmatprep.subr.mxu0 0.0
        %639 = vmatpush1.msra.mxu0 0.0
        %640 = vmatprep.subr.mxu0 0.0
        %641 = vmatpush1.msra.mxu0 0.0
        %642 = vmatprep.subr.mxu0 0.0
        %643 = vmatpush1.msra.mxu0 0.0
        %644 = vmatprep.subr.mxu0 0.0
        %645 = vmatpush1.msra.mxu0 0.0
        %646 = vmatprep.subr.mxu0 0.0
        %647 = vmatpush1.msra.mxu0 0.0
        %648 = vmatprep.subr.mxu0 0.0
        %649 = vmatpush1.msra.mxu0 0.0
        %650 = vmatprep.subr.mxu0 0.0
        %651 = vmatpush1.msra.mxu0 0.0
        %652 = vmatprep.subr.mxu0 0.0
        %653 = vmatpush1.msra.mxu0 0.0
        %654 = vmatprep.subr.mxu0 0.0
        %655 = vmatpush1.msra.mxu0 0.0
        %656 = vmatprep.subr.mxu0 0.0
        %657 = vmatpush1.msra.mxu0 0.0
        %658 = vmatprep.subr.mxu0 0.0
        %659 = vmatpush1.msra.mxu0 0.0
        %660 = vmatprep.subr.mxu0 0.0
        %661 = vmatpush1.msra.mxu0 0.0
        %662 = vmatprep.subr.mxu0 0.0
        %663 = vmatpush1.msra.mxu0 0.0
        %664 = vmatprep.subr.mxu0 0.0
        %665 = vmatpush1.msra.mxu0 0.0
        %666 = vmatprep.subr.mxu0 0.0
        %667 = vmatpush1.msra.mxu0 0.0
        %668 = vmatprep.subr.mxu0 0.0
        %669 = vmatpush1.msra.mxu0 0.0
        %670 = vmatprep.subr.mxu0 0.0
        %671 = vmatpush1.msra.mxu0 0.0
        %672 = vmatprep.subr.mxu0 0.0
        %673 = vmatpush1.msra.mxu0 0.0
        %674 = vmatprep.subr.mxu0 0.0
        %675 = vmatpush1.msra.mxu0 0.0
        %676 = vmatprep.subr.mxu0 0.0
        %677 = vmatpush1.msra.mxu0 0.0
        %678 = vmatprep.mubr.f32.mxu0 0.0
        %679 = vmatmul.mubr.f32.gmra.mrb[0].mxu0 %v328
        %v680 = vpop.f32.mrb[0].mxu0
        %v681 = vadd.f32 0.0, %v680
        %v682 = vpop.f32.mrb[0].mxu0
        %v683 = vadd.f32 0.0, %v682
        %684 = vdwg.mxu0
        %685 = vmatprep.subr.mxu0 %v290
        %686 = vmatpush1.msra.mxu0 %v289
        %687 = vmatprep.subr.mxu0 %v302
        %688 = vmatpush1.msra.mxu0 %v301
        %689 = vmatprep.subr.mxu0 %v314
        %690 = vmatpush1.msra.mxu0 %v313
        %691 = vmatprep.subr.mxu0 %v326
        %692 = vmatpush1.msra.mxu0 %v325
        %693 = vmatprep.subr.mxu0 0.0
        %694 = vmatpush1.msra.mxu0 0.0
        %695 = vmatprep.subr.mxu0 0.0
        %696 = vmatpush1.msra.mxu0 0.0
        %697 = vmatprep.subr.mxu0 0.0
        %698 = vmatpush1.msra.mxu0 0.0
        %699 = vmatprep.subr.mxu0 0.0
        %700 = vmatpush1.msra.mxu0 0.0
        %701 = vmatprep.subr.mxu0 0.0
        %702 = vmatpush1.msra.mxu0 0.0
        %703 = vmatprep.subr.mxu0 0.0
        %704 = vmatpush1.msra.mxu0 0.0
        %705 = vmatprep.subr.mxu0 0.0
        %706 = vmatpush1.msra.mxu0 0.0
        %707 = vmatprep.subr.mxu0 0.0
        %708 = vmatpush1.msra.mxu0 0.0
        %709 = vmatprep.subr.mxu0 0.0
        %710 = vmatpush1.msra.mxu0 0.0
        %711 = vmatprep.subr.mxu0 0.0
        %712 = vmatpush1.msra.mxu0 0.0
        %713 = vmatprep.subr.mxu0 0.0
        %714 = vmatpush1.msra.mxu0 0.0
        %715 = vmatprep.subr.mxu0 0.0
        %716 = vmatpush1.msra.mxu0 0.0
        %717 = vmatprep.subr.mxu0 0.0
        %718 = vmatpush1.msra.mxu0 0.0
        %719 = vmatprep.subr.mxu0 0.0
        %720 = vmatpush1.msra.mxu0 0.0
        %721 = vmatprep.subr.mxu0 0.0
        %722 = vmatpush1.msra.mxu0 0.0
        %723 = vmatprep.subr.mxu0 0.0
        %724 = vmatpush1.msra.mxu0 0.0
        %725 = vmatprep.subr.mxu0 0.0
        %726 = vmatpush1.msra.mxu0 0.0
        %727 = vmatprep.subr.mxu0 0.0
        %728 = vmatpush1.msra.mxu0 0.0
        %729 = vmatprep.subr.mxu0 0.0
        %730 = vmatpush1.msra.mxu0 0.0
        %731 = vmatprep.subr.mxu0 0.0
        %732 = vmatpush1.msra.mxu0 0.0
        %733 = vmatprep.subr.mxu0 0.0
        %734 = vmatpush1.msra.mxu0 0.0
        %735 = vmatprep.subr.mxu0 0.0
        %736 = vmatpush1.msra.mxu0 0.0
        %737 = vmatprep.subr.mxu0 0.0
        %738 = vmatpush1.msra.mxu0 0.0
        %739 = vmatprep.subr.mxu0 0.0
        %740 = vmatpush1.msra.mxu0 0.0
        %741 = vmatprep.subr.mxu0 0.0
        %742 = vmatpush1.msra.mxu0 0.0
        %743 = vmatprep.subr.mxu0 0.0
        %744 = vmatpush1.msra.mxu0 0.0
        %745 = vmatprep.subr.mxu0 0.0
        %746 = vmatpush1.msra.mxu0 0.0
        %747 = vmatprep.subr.mxu0 0.0
        %748 = vmatpush1.msra.mxu0 0.0
        %749 = vmatprep.mubr.f32.mxu0 0.0
        %750 = vmatmul.mubr.f32.gmra.mrb[0].mxu0 %v328
        %v751 = vpop.f32.mrb[0].mxu0
        %v752 = vadd.f32 0.0, %v751
        %v753 = vpop.f32.mrb[0].mxu0
        %v754 = vadd.f32 0.0, %v753
        %755 = vdwg.mxu0
        %vm756 = vcmask 523264
        %v758 = vsel %vm756, %v397, 0
        %v761 = vsel %vm756, %v539, 0
        %763 = vmatprep.subr.mxu0 0.0
        %764 = vmatpush1.xpose.msra.mxu0 %v761
        %765 = vmatprep.subr.mxu0 0.0
        %766 = vmatpush1.xpose.msra.mxu0 0.0
        %767 = vmatprep.subr.mxu0 0.0
        %768 = vmatpush1.xpose.msra.mxu0 0.0
        %769 = vmatprep.subr.mxu0 0.0
        %770 = vmatpush1.xpose.msra.mxu0 0.0
        %771 = vmatprep.subr.mxu0 0.0
        %772 = vmatpush1.xpose.msra.mxu0 0.0
        %773 = vmatprep.subr.mxu0 0.0
        %774 = vmatpush1.xpose.msra.mxu0 0.0
        %775 = vmatprep.subr.mxu0 0.0
        %776 = vmatpush1.xpose.msra.mxu0 0.0
        %777 = vmatprep.subr.mxu0 0.0
        %778 = vmatpush1.xpose.msra.mxu0 0.0
        %779 = vmatprep.subr.mxu0 0.0
        %780 = vmatpush1.xpose.msra.mxu0 0.0
        %781 = vmatprep.subr.mxu0 0.0
        %782 = vmatpush1.xpose.msra.mxu0 0.0
        %783 = vmatprep.subr.mxu0 0.0
        %784 = vmatpush1.xpose.msra.mxu0 0.0
        %785 = vmatprep.subr.mxu0 0.0
        %786 = vmatpush1.xpose.msra.mxu0 0.0
        %787 = vmatprep.subr.mxu0 0.0
        %788 = vmatpush1.xpose.msra.mxu0 0.0
        %789 = vmatprep.subr.mxu0 0.0
        %790 = vmatpush1.xpose.msra.mxu0 0.0
        %791 = vmatprep.subr.mxu0 0.0
        %792 = vmatpush1.xpose.msra.mxu0 0.0
        %793 = vmatprep.subr.mxu0 0.0
        %794 = vmatpush1.xpose.msra.mxu0 0.0
        %795 = vmatprep.subr.mxu0 0.0
        %796 = vmatpush1.xpose.msra.mxu0 0.0
        %797 = vmatprep.subr.mxu0 0.0
        %798 = vmatpush1.xpose.msra.mxu0 0.0
        %799 = vmatprep.subr.mxu0 0.0
        %800 = vmatpush1.xpose.msra.mxu0 0.0
        %801 = vmatprep.subr.mxu0 0.0
        %802 = vmatpush1.xpose.msra.mxu0 0.0
        %803 = vmatprep.subr.mxu0 0.0
        %804 = vmatpush1.xpose.msra.mxu0 0.0
        %805 = vmatprep.subr.mxu0 0.0
        %806 = vmatpush1.xpose.msra.mxu0 0.0
        %807 = vmatprep.subr.mxu0 0.0
        %808 = vmatpush1.xpose.msra.mxu0 0.0
        %809 = vmatprep.subr.mxu0 0.0
        %810 = vmatpush1.xpose.msra.mxu0 0.0
        %811 = vmatprep.subr.mxu0 0.0
        %812 = vmatpush1.xpose.msra.mxu0 0.0
        %813 = vmatprep.subr.mxu0 0.0
        %814 = vmatpush1.xpose.msra.mxu0 0.0
        %815 = vmatprep.subr.mxu0 0.0
        %816 = vmatpush1.xpose.msra.mxu0 0.0
        %817 = vmatprep.subr.mxu0 0.0
        %818 = vmatpush1.xpose.msra.mxu0 0.0
        %819 = vmatprep.subr.mxu0 0.0
        %820 = vmatpush1.xpose.msra.mxu0 0.0
        %821 = vmatprep.subr.mxu0 0.0
        %822 = vmatpush1.xpose.msra.mxu0 0.0
        %823 = vmatprep.subr.mxu0 0.0
        %824 = vmatpush1.xpose.msra.mxu0 0.0
        %825 = vmatprep.subr.mxu0 0.0
        %826 = vmatpush1.xpose.msra.mxu0 0.0
        %827 = vmatprep.mubr.f32.mxu0 0.0
        %828 = vmatmul.mubr.f32.gmra.mrb[0].mxu0 %v758
        %v829 = vpop.f32.mrb[0].mxu0
        %v830 = vadd.f32 0.0, %v829
        %v831 = vpop.f32.mrb[0].mxu0
        %832 = vdwg.mxu0
        %v833 = vmul.f32 %v830, 0.125
        %vm834 = vcmask 64512
        %v835 = vsel %vm834, %v833, -inf
        %836 = vmax.xlane.f32.xlu0 %v835
        %v837 = vpop.xlane.xlu0 %836
        %v838 = vsub.f32 %v833, %v837
        %v839 = vmul.f32 %v838, 1.442695
        %v840 = vpow.pop %v839
        %v841 = vsel %vm834, %v840, 0.0
        %842 = vadd.xlane.f32.xlu0 %v841
        %v843 = vpop.xlane.xlu0 %842
        %v844 = vrcp.pop %v843
        %v845 = vmul.f32 %v840, %v844
        %v847 = vsel %vm834, %v845, 0
        %849 = vmatprep.subr.mxu0 0.0
        %850 = vmatpush1.msra.mxu0 %v681
        %851 = vmatprep.subr.mxu0 0.0
        %852 = vmatpush1.msra.mxu0 0.0
        %853 = vmatprep.subr.mxu0 0.0
        %854 = vmatpush1.msra.mxu0 0.0
        %855 = vmatprep.subr.mxu0 0.0
        %856 = vmatpush1.msra.mxu0 0.0
        %857 = vmatprep.subr.mxu0 0.0
        %858 = vmatpush1.msra.mxu0 0.0
        %859 = vmatprep.subr.mxu0 0.0
        %860 = vmatpush1.msra.mxu0 0.0
        %861 = vmatprep.subr.mxu0 0.0
        %862 = vmatpush1.msra.mxu0 0.0
        %863 = vmatprep.subr.mxu0 0.0
        %864 = vmatpush1.msra.mxu0 0.0
        %865 = vmatprep.subr.mxu0 0.0
        %866 = vmatpush1.msra.mxu0 0.0
        %867 = vmatprep.subr.mxu0 0.0
        %868 = vmatpush1.msra.mxu0 0.0
        %869 = vmatprep.subr.mxu0 0.0
        %870 = vmatpush1.msra.mxu0 0.0
        %871 = vmatprep.subr.mxu0 0.0
        %872 = vmatpush1.msra.mxu0 0.0
        %873 = vmatprep.subr.mxu0 0.0
        %874 = vmatpush1.msra.mxu0 0.0
        %875 = vmatprep.subr.mxu0 0.0
        %876 = vmatpush1.msra.mxu0 0.0
        %877 = vmatprep.subr.mxu0 0.0
        %878 = vmatpush1.msra.mxu0 0.0
        %879 = vmatprep.subr.mxu0 0.0
        %880 = vmatpush1.msra.mxu0 0.0
        %881 = vmatprep.subr.mxu0 0.0
        %882 = vmatpush1.msra.mxu0 0.0
        %883 = vmatprep.subr.mxu0 0.0
        %884 = vmatpush1.msra.mxu0 0.0
        %885 = vmatprep.subr.mxu0 0.0
        %886 = vmatpush1.msra.mxu0 0.0
        %887 = vmatprep.subr.mxu0 0.0
        %888 = vmatpush1.msra.mxu0 0.0
        %889 = vmatprep.subr.mxu0 0.0
        %890 = vmatpush1.msra.mxu0 0.0
        %891 = vmatprep.subr.mxu0 0.0
        %892 = vmatpush1.msra.mxu0 0.0
        %893 = vmatprep.subr.mxu0 0.0
        %894 = vmatpush1.msra.mxu0 0.0
        %895 = vmatprep.subr.mxu0 0.0
        %896 = vmatpush1.msra.mxu0 0.0
        %897 = vmatprep.subr.mxu0 0.0
        %898 = vmatpush1.msra.mxu0 0.0
        %899 = vmatprep.subr.mxu0 0.0
        %900 = vmatpush1.msra.mxu0 0.0
        %901 = vmatprep.subr.mxu0 0.0
        %902 = vmatpush1.msra.mxu0 0.0
        %903 = vmatprep.subr.mxu0 0.0
        %904 = vmatpush1.msra.mxu0 0.0
        %905 = vmatprep.subr.mxu0 0.0
        %906 = vmatpush1.msra.mxu0 0.0
        %907 = vmatprep.subr.mxu0 0.0
        %908 = vmatpush1.msra.mxu0 0.0
        %909 = vmatprep.subr.mxu0 0.0
        %910 = vmatpush1.msra.mxu0 0.0
        %911 = vmatprep.subr.mxu0 0.0
        %912 = vmatpush1.msra.mxu0 0.0
        %913 = vmatprep.mubr.f32.mxu0 0.0
        %914 = vmatmul.mubr.f32.gmra.mrb[0].mxu0 %v847
        %v915 = vpop.f32.mrb[0].mxu0
        %v916 = vadd.f32 0.0, %v915
        %v917 = vpop.f32.mrb[0].mxu0
        %918 = vdwg.mxu0
        %919 = vrot.lane.b32.xlu0 %v397, 64
        %v920 = vpop.permute.xlu0 %919
        %921 = vrot.lane.b32.xlu0 %v539, 64
        %v922 = vpop.permute.xlu0 %921
        %v923 = vsel %vm756, %v920, 0
        %v925 = vsel %vm756, %v922, 0
        %927 = vmatprep.subr.mxu0 0.0
        %928 = vmatpush1.xpose.msra.mxu0 %v925
        %929 = vmatprep.subr.mxu0 0.0
        %930 = vmatpush1.xpose.msra.mxu0 0.0
        %931 = vmatprep.subr.mxu0 0.0
        %932 = vmatpush1.xpose.msra.mxu0 0.0
        %933 = vmatprep.subr.mxu0 0.0
        %934 = vmatpush1.xpose.msra.mxu0 0.0
        %935 = vmatprep.subr.mxu0 0.0
        %936 = vmatpush1.xpose.msra.mxu0 0.0
        %937 = vmatprep.subr.mxu0 0.0
        %938 = vmatpush1.xpose.msra.mxu0 0.0
        %939 = vmatprep.subr.mxu0 0.0
        %940 = vmatpush1.xpose.msra.mxu0 0.0
        %941 = vmatprep.subr.mxu0 0.0
        %942 = vmatpush1.xpose.msra.mxu0 0.0
        %943 = vmatprep.subr.mxu0 0.0
        %944 = vmatpush1.xpose.msra.mxu0 0.0
        %945 = vmatprep.subr.mxu0 0.0
        %946 = vmatpush1.xpose.msra.mxu0 0.0
        %947 = vmatprep.subr.mxu0 0.0
        %948 = vmatpush1.xpose.msra.mxu0 0.0
        %949 = vmatprep.subr.mxu0 0.0
        %950 = vmatpush1.xpose.msra.mxu0 0.0
        %951 = vmatprep.subr.mxu0 0.0
        %952 = vmatpush1.xpose.msra.mxu0 0.0
        %953 = vmatprep.subr.mxu0 0.0
        %954 = vmatpush1.xpose.msra.mxu0 0.0
        %955 = vmatprep.subr.mxu0 0.0
        %956 = vmatpush1.xpose.msra.mxu0 0.0
        %957 = vmatprep.subr.mxu0 0.0
        %958 = vmatpush1.xpose.msra.mxu0 0.0
        %959 = vmatprep.subr.mxu0 0.0
        %960 = vmatpush1.xpose.msra.mxu0 0.0
        %961 = vmatprep.subr.mxu0 0.0
        %962 = vmatpush1.xpose.msra.mxu0 0.0
        %963 = vmatprep.subr.mxu0 0.0
        %964 = vmatpush1.xpose.msra.mxu0 0.0
        %965 = vmatprep.subr.mxu0 0.0
        %966 = vmatpush1.xpose.msra.mxu0 0.0
        %967 = vmatprep.subr.mxu0 0.0
        %968 = vmatpush1.xpose.msra.mxu0 0.0
        %969 = vmatprep.subr.mxu0 0.0
        %970 = vmatpush1.xpose.msra.mxu0 0.0
        %971 = vmatprep.subr.mxu0 0.0
        %972 = vmatpush1.xpose.msra.mxu0 0.0
        %973 = vmatprep.subr.mxu0 0.0
        %974 = vmatpush1.xpose.msra.mxu0 0.0
        %975 = vmatprep.subr.mxu0 0.0
        %976 = vmatpush1.xpose.msra.mxu0 0.0
        %977 = vmatprep.subr.mxu0 0.0
        %978 = vmatpush1.xpose.msra.mxu0 0.0
        %979 = vmatprep.subr.mxu0 0.0
        %980 = vmatpush1.xpose.msra.mxu0 0.0
        %981 = vmatprep.subr.mxu0 0.0
        %982 = vmatpush1.xpose.msra.mxu0 0.0
        %983 = vmatprep.subr.mxu0 0.0
        %984 = vmatpush1.xpose.msra.mxu0 0.0
        %985 = vmatprep.subr.mxu0 0.0
        %986 = vmatpush1.xpose.msra.mxu0 0.0
        %987 = vmatprep.subr.mxu0 0.0
        %988 = vmatpush1.xpose.msra.mxu0 0.0
        %989 = vmatprep.subr.mxu0 0.0
        %990 = vmatpush1.xpose.msra.mxu0 0.0
        %991 = vmatprep.mubr.f32.mxu0 0.0
        %992 = vmatmul.mubr.f32.gmra.mrb[0].mxu0 %v923
        %v993 = vpop.f32.mrb[0].mxu0
        %v994 = vadd.f32 0.0, %v993
        %v995 = vpop.f32.mrb[0].mxu0
        %996 = vdwg.mxu0
        %v997 = vmul.f32 %v994, 0.125
        %v998 = vsel %vm834, %v997, -inf
        %999 = vmax.xlane.f32.xlu0 %v998
        %v1000 = vpop.xlane.xlu0 %999
        %v1001 = vsub.f32 %v997, %v1000
        %v1002 = vmul.f32 %v1001, 1.442695
        %v1003 = vpow.pop %v1002
        %v1004 = vsel %vm834, %v1003, 0.0
        %1005 = vadd.xlane.f32.xlu0 %v1004
        %v1006 = vpop.xlane.xlu0 %1005
        %v1007 = vrcp.pop %v1006
        %v1008 = vmul.f32 %v1003, %v1007
        %1010 = vrot.lane.b32.xlu0 %v681, 64
        %v1011 = vpop.permute.xlu0 %1010
        %v1014 = vsel %vm834, %v1008, 0
        %1016 = vmatprep.subr.mxu0 0.0
        %1017 = vmatpush1.msra.mxu0 %v1011
        %1018 = vmatprep.subr.mxu0 0.0
        %1019 = vmatpush1.msra.mxu0 0.0
        %1020 = vmatprep.subr.mxu0 0.0
        %1021 = vmatpush1.msra.mxu0 0.0
        %1022 = vmatprep.subr.mxu0 0.0
        %1023 = vmatpush1.msra.mxu0 0.0
        %1024 = vmatprep.subr.mxu0 0.0
        %1025 = vmatpush1.msra.mxu0 0.0
        %1026 = vmatprep.subr.mxu0 0.0
        %1027 = vmatpush1.msra.mxu0 0.0
        %1028 = vmatprep.subr.mxu0 0.0
        %1029 = vmatpush1.msra.mxu0 0.0
        %1030 = vmatprep.subr.mxu0 0.0
        %1031 = vmatpush1.msra.mxu0 0.0
        %1032 = vmatprep.subr.mxu0 0.0
        %1033 = vmatpush1.msra.mxu0 0.0
        %1034 = vmatprep.subr.mxu0 0.0
        %1035 = vmatpush1.msra.mxu0 0.0
        %1036 = vmatprep.subr.mxu0 0.0
        %1037 = vmatpush1.msra.mxu0 0.0
        %1038 = vmatprep.subr.mxu0 0.0
        %1039 = vmatpush1.msra.mxu0 0.0
        %1040 = vmatprep.subr.mxu0 0.0
        %1041 = vmatpush1.msra.mxu0 0.0
        %1042 = vmatprep.subr.mxu0 0.0
        %1043 = vmatpush1.msra.mxu0 0.0
        %1044 = vmatprep.subr.mxu0 0.0
        %1045 = vmatpush1.msra.mxu0 0.0
        %1046 = vmatprep.subr.mxu0 0.0
        %1047 = vmatpush1.msra.mxu0 0.0
        %1048 = vmatprep.subr.mxu0 0.0
        %1049 = vmatpush1.msra.mxu0 0.0
        %1050 = vmatprep.subr.mxu0 0.0
        %1051 = vmatpush1.msra.mxu0 0.0
        %1052 = vmatprep.subr.mxu0 0.0
        %1053 = vmatpush1.msra.mxu0 0.0
        %1054 = vmatprep.subr.mxu0 0.0
        %1055 = vmatpush1.msra.mxu0 0.0
        %1056 = vmatprep.subr.mxu0 0.0
        %1057 = vmatpush1.msra.mxu0 0.0
        %1058 = vmatprep.subr.mxu0 0.0
        %1059 = vmatpush1.msra.mxu0 0.0
        %1060 = vmatprep.subr.mxu0 0.0
        %1061 = vmatpush1.msra.mxu0 0.0
        %1062 = vmatprep.subr.mxu0 0.0
        %1063 = vmatpush1.msra.mxu0 0.0
        %1064 = vmatprep.subr.mxu0 0.0
        %1065 = vmatpush1.msra.mxu0 0.0
        %1066 = vmatprep.subr.mxu0 0.0
        %1067 = vmatpush1.msra.mxu0 0.0
        %1068 = vmatprep.subr.mxu0 0.0
        %1069 = vmatpush1.msra.mxu0 0.0
        %1070 = vmatprep.subr.mxu0 0.0
        %1071 = vmatpush1.msra.mxu0 0.0
        %1072 = vmatprep.subr.mxu0 0.0
        %1073 = vmatpush1.msra.mxu0 0.0
        %1074 = vmatprep.subr.mxu0 0.0
        %1075 = vmatpush1.msra.mxu0 0.0
        %1076 = vmatprep.subr.mxu0 0.0
        %1077 = vmatpush1.msra.mxu0 0.0
        %1078 = vmatprep.subr.mxu0 0.0
        %1079 = vmatpush1.msra.mxu0 0.0
        %1080 = vmatprep.mubr.f32.mxu0 0.0
        %1081 = vmatmul.mubr.f32.gmra.mrb[0].mxu0 %v1014
        %v1082 = vpop.f32.mrb[0].mxu0
        %v1083 = vadd.f32 0.0, %v1082
        %v1084 = vpop.f32.mrb[0].mxu0
        %1085 = vdwg.mxu0
        %v1087 = vsel %vm756, %v399, 0
        %v1090 = vsel %vm756, %v541, 0
        %1092 = vmatprep.subr.mxu0 0.0
        %1093 = vmatpush1.xpose.msra.mxu0 %v1090
        %1094 = vmatprep.subr.mxu0 0.0
        %1095 = vmatpush1.xpose.msra.mxu0 0.0
        %1096 = vmatprep.subr.mxu0 0.0
        %1097 = vmatpush1.xpose.msra.mxu0 0.0
        %1098 = vmatprep.subr.mxu0 0.0
        %1099 = vmatpush1.xpose.msra.mxu0 0.0
        %1100 = vmatprep.subr.mxu0 0.0
        %1101 = vmatpush1.xpose.msra.mxu0 0.0
        %1102 = vmatprep.subr.mxu0 0.0
        %1103 = vmatpush1.xpose.msra.mxu0 0.0
        %1104 = vmatprep.subr.mxu0 0.0
        %1105 = vmatpush1.xpose.msra.mxu0 0.0
        %1106 = vmatprep.subr.mxu0 0.0
        %1107 = vmatpush1.xpose.msra.mxu0 0.0
        %1108 = vmatprep.subr.mxu0 0.0
        %1109 = vmatpush1.xpose.msra.mxu0 0.0
        %1110 = vmatprep.subr.mxu0 0.0
        %1111 = vmatpush1.xpose.msra.mxu0 0.0
        %1112 = vmatprep.subr.mxu0 0.0
        %1113 = vmatpush1.xpose.msra.mxu0 0.0
        %1114 = vmatprep.subr.mxu0 0.0
        %1115 = vmatpush1.xpose.msra.mxu0 0.0
        %1116 = vmatprep.subr.mxu0 0.0
        %1117 = vmatpush1.xpose.msra.mxu0 0.0
        %1118 = vmatprep.subr.mxu0 0.0
        %1119 = vmatpush1.xpose.msra.mxu0 0.0
        %1120 = vmatprep.subr.mxu0 0.0
        %1121 = vmatpush1.xpose.msra.mxu0 0.0
        %1122 = vmatprep.subr.mxu0 0.0
        %1123 = vmatpush1.xpose.msra.mxu0 0.0
        %1124 = vmatprep.subr.mxu0 0.0
        %1125 = vmatpush1.xpose.msra.mxu0 0.0
        %1126 = vmatprep.subr.mxu0 0.0
        %1127 = vmatpush1.xpose.msra.mxu0 0.0
        %1128 = vmatprep.subr.mxu0 0.0
        %1129 = vmatpush1.xpose.msra.mxu0 0.0
        %1130 = vmatprep.subr.mxu0 0.0
        %1131 = vmatpush1.xpose.msra.mxu0 0.0
        %1132 = vmatprep.subr.mxu0 0.0
        %1133 = vmatpush1.xpose.msra.mxu0 0.0
        %1134 = vmatprep.subr.mxu0 0.0
        %1135 = vmatpush1.xpose.msra.mxu0 0.0
        %1136 = vmatprep.subr.mxu0 0.0
        %1137 = vmatpush1.xpose.msra.mxu0 0.0
        %1138 = vmatprep.subr.mxu0 0.0
        %1139 = vmatpush1.xpose.msra.mxu0 0.0
        %1140 = vmatprep.subr.mxu0 0.0
        %1141 = vmatpush1.xpose.msra.mxu0 0.0
        %1142 = vmatprep.subr.mxu0 0.0
        %1143 = vmatpush1.xpose.msra.mxu0 0.0
        %1144 = vmatprep.subr.mxu0 0.0
        %1145 = vmatpush1.xpose.msra.mxu0 0.0
        %1146 = vmatprep.subr.mxu0 0.0
        %1147 = vmatpush1.xpose.msra.mxu0 0.0
        %1148 = vmatprep.subr.mxu0 0.0
        %1149 = vmatpush1.xpose.msra.mxu0 0.0
        %1150 = vmatprep.subr.mxu0 0.0
        %1151 = vmatpush1.xpose.msra.mxu0 0.0
        %1152 = vmatprep.subr.mxu0 0.0
        %1153 = vmatpush1.xpose.msra.mxu0 0.0
        %1154 = vmatprep.subr.mxu0 0.0
        %1155 = vmatpush1.xpose.msra.mxu0 0.0
        %1156 = vmatprep.mubr.f32.mxu0 0.0
        %1157 = vmatmul.mubr.f32.gmra.mrb[0].mxu0 %v1087
        %v1158 = vpop.f32.mrb[0].mxu0
        %v1159 = vadd.f32 0.0, %v1158
        %v1160 = vpop.f32.mrb[0].mxu0
        %1161 = vdwg.mxu0
        %v1162 = vmul.f32 %v1159, 0.125
        %v1163 = vsel %vm834, %v1162, -inf
        %1164 = vmax.xlane.f32.xlu0 %v1163
        %v1165 = vpop.xlane.xlu0 %1164
        %v1166 = vsub.f32 %v1162, %v1165
        %v1167 = vmul.f32 %v1166, 1.442695
        %v1168 = vpow.pop %v1167
        %v1169 = vsel %vm834, %v1168, 0.0
        %1170 = vadd.xlane.f32.xlu0 %v1169
        %v1171 = vpop.xlane.xlu0 %1170
        %v1172 = vrcp.pop %v1171
        %v1173 = vmul.f32 %v1168, %v1172
        %v1175 = vsel %vm834, %v1173, 0
        %1177 = vmatprep.subr.mxu0 0.0
        %1178 = vmatpush1.msra.mxu0 %v683
        %1179 = vmatprep.subr.mxu0 0.0
        %1180 = vmatpush1.msra.mxu0 0.0
        %1181 = vmatprep.subr.mxu0 0.0
        %1182 = vmatpush1.msra.mxu0 0.0
        %1183 = vmatprep.subr.mxu0 0.0
        %1184 = vmatpush1.msra.mxu0 0.0
        %1185 = vmatprep.subr.mxu0 0.0
        %1186 = vmatpush1.msra.mxu0 0.0
        %1187 = vmatprep.subr.mxu0 0.0
        %1188 = vmatpush1.msra.mxu0 0.0
        %1189 = vmatprep.subr.mxu0 0.0
        %1190 = vmatpush1.msra.mxu0 0.0
        %1191 = vmatprep.subr.mxu0 0.0
        %1192 = vmatpush1.msra.mxu0 0.0
        %1193 = vmatprep.subr.mxu0 0.0
        %1194 = vmatpush1.msra.mxu0 0.0
        %1195 = vmatprep.subr.mxu0 0.0
        %1196 = vmatpush1.msra.mxu0 0.0
        %1197 = vmatprep.subr.mxu0 0.0
        %1198 = vmatpush1.msra.mxu0 0.0
        %1199 = vmatprep.subr.mxu0 0.0
        %1200 = vmatpush1.msra.mxu0 0.0
        %1201 = vmatprep.subr.mxu0 0.0
        %1202 = vmatpush1.msra.mxu0 0.0
        %1203 = vmatprep.subr.mxu0 0.0
        %1204 = vmatpush1.msra.mxu0 0.0
        %1205 = vmatprep.subr.mxu0 0.0
        %1206 = vmatpush1.msra.mxu0 0.0
        %1207 = vmatprep.subr.mxu0 0.0
        %1208 = vmatpush1.msra.mxu0 0.0
        %1209 = vmatprep.subr.mxu0 0.0
        %1210 = vmatpush1.msra.mxu0 0.0
        %1211 = vmatprep.subr.mxu0 0.0
        %1212 = vmatpush1.msra.mxu0 0.0
        %1213 = vmatprep.subr.mxu0 0.0
        %1214 = vmatpush1.msra.mxu0 0.0
        %1215 = vmatprep.subr.mxu0 0.0
        %1216 = vmatpush1.msra.mxu0 0.0
        %1217 = vmatprep.subr.mxu0 0.0
        %1218 = vmatpush1.msra.mxu0 0.0
        %1219 = vmatprep.subr.mxu0 0.0
        %1220 = vmatpush1.msra.mxu0 0.0
        %1221 = vmatprep.subr.mxu0 0.0
        %1222 = vmatpush1.msra.mxu0 0.0
        %1223 = vmatprep.subr.mxu0 0.0
        %1224 = vmatpush1.msra.mxu0 0.0
        %1225 = vmatprep.subr.mxu0 0.0
        %1226 = vmatpush1.msra.mxu0 0.0
        %1227 = vmatprep.subr.mxu0 0.0
        %1228 = vmatpush1.msra.mxu0 0.0
        %1229 = vmatprep.subr.mxu0 0.0
        %1230 = vmatpush1.msra.mxu0 0.0
        %1231 = vmatprep.subr.mxu0 0.0
        %1232 = vmatpush1.msra.mxu0 0.0
        %1233 = vmatprep.subr.mxu0 0.0
        %1234 = vmatpush1.msra.mxu0 0.0
        %1235 = vmatprep.subr.mxu0 0.0
        %1236 = vmatpush1.msra.mxu0 0.0
        %1237 = vmatprep.subr.mxu0 0.0
        %1238 = vmatpush1.msra.mxu0 0.0
        %1239 = vmatprep.subr.mxu0 0.0
        %1240 = vmatpush1.msra.mxu0 0.0
        %1241 = vmatprep.mubr.f32.mxu0 0.0
        %1242 = vmatmul.mubr.f32.gmra.mrb[0].mxu0 %v1175
        %v1243 = vpop.f32.mrb[0].mxu0
        %v1244 = vadd.f32 0.0, %v1243
        %v1245 = vpop.f32.mrb[0].mxu0
        %1246 = vdwg.mxu0
        %1247 = vrot.lane.b32.xlu0 %v399, 64
        %v1248 = vpop.permute.xlu0 %1247
        %1249 = vrot.lane.b32.xlu0 %v541, 64
        %v1250 = vpop.permute.xlu0 %1249
        %v1251 = vsel %vm756, %v1248, 0
        %v1253 = vsel %vm756, %v1250, 0
        %1255 = vmatprep.subr.mxu0 0.0
        %1256 = vmatpush1.xpose.msra.mxu0 %v1253
        %1257 = vmatprep.subr.mxu0 0.0
        %1258 = vmatpush1.xpose.msra.mxu0 0.0
        %1259 = vmatprep.subr.mxu0 0.0
        %1260 = vmatpush1.xpose.msra.mxu0 0.0
        %1261 = vmatprep.subr.mxu0 0.0
        %1262 = vmatpush1.xpose.msra.mxu0 0.0
        %1263 = vmatprep.subr.mxu0 0.0
        %1264 = vmatpush1.xpose.msra.mxu0 0.0
        %1265 = vmatprep.subr.mxu0 0.0
        %1266 = vmatpush1.xpose.msra.mxu0 0.0
        %1267 = vmatprep.subr.mxu0 0.0
        %1268 = vmatpush1.xpose.msra.mxu0 0.0
        %1269 = vmatprep.subr.mxu0 0.0
        %1270 = vmatpush1.xpose.msra.mxu0 0.0
        %1271 = vmatprep.subr.mxu0 0.0
        %1272 = vmatpush1.xpose.msra.mxu0 0.0
        %1273 = vmatprep.subr.mxu0 0.0
        %1274 = vmatpush1.xpose.msra.mxu0 0.0
        %1275 = vmatprep.subr.mxu0 0.0
        %1276 = vmatpush1.xpose.msra.mxu0 0.0
        %1277 = vmatprep.subr.mxu0 0.0
        %1278 = vmatpush1.xpose.msra.mxu0 0.0
        %1279 = vmatprep.subr.mxu0 0.0
        %1280 = vmatpush1.xpose.msra.mxu0 0.0
        %1281 = vmatprep.subr.mxu0 0.0
        %1282 = vmatpush1.xpose.msra.mxu0 0.0
        %1283 = vmatprep.subr.mxu0 0.0
        %1284 = vmatpush1.xpose.msra.mxu0 0.0
        %1285 = vmatprep.subr.mxu0 0.0
        %1286 = vmatpush1.xpose.msra.mxu0 0.0
        %1287 = vmatprep.subr.mxu0 0.0
        %1288 = vmatpush1.xpose.msra.mxu0 0.0
        %1289 = vmatprep.subr.mxu0 0.0
        %1290 = vmatpush1.xpose.msra.mxu0 0.0
        %1291 = vmatprep.subr.mxu0 0.0
        %1292 = vmatpush1.xpose.msra.mxu0 0.0
        %1293 = vmatprep.subr.mxu0 0.0
        %1294 = vmatpush1.xpose.msra.mxu0 0.0
        %1295 = vmatprep.subr.mxu0 0.0
        %1296 = vmatpush1.xpose.msra.mxu0 0.0
        %1297 = vmatprep.subr.mxu0 0.0
        %1298 = vmatpush1.xpose.msra.mxu0 0.0
        %1299 = vmatprep.subr.mxu0 0.0
        %1300 = vmatpush1.xpose.msra.mxu0 0.0
        %1301 = vmatprep.subr.mxu0 0.0
        %1302 = vmatpush1.xpose.msra.mxu0 0.0
        %1303 = vmatprep.subr.mxu0 0.0
        %1304 = vmatpush1.xpose.msra.mxu0 0.0
        %1305 = vmatprep.subr.mxu0 0.0
        %1306 = vmatpush1.xpose.msra.mxu0 0.0
        %1307 = vmatprep.subr.mxu0 0.0
        %1308 = vmatpush1.xpose.msra.mxu0 0.0
        %1309 = vmatprep.subr.mxu0 0.0
        %1310 = vmatpush1.xpose.msra.mxu0 0.0
        %1311 = vmatprep.subr.mxu0 0.0
        %1312 = vmatpush1.xpose.msra.mxu0 0.0
        %1313 = vmatprep.subr.mxu0 0.0
        %1314 = vmatpush1.xpose.msra.mxu0 0.0
        %1315 = vmatprep.subr.mxu0 0.0
        %1316 = vmatpush1.xpose.msra.mxu0 0.0
        %1317 = vmatprep.subr.mxu0 0.0
        %1318 = vmatpush1.xpose.msra.mxu0 0.0
        %1319 = vmatprep.mubr.f32.mxu0 0.0
        %1320 = vmatmul.mubr.f32.gmra.mrb[0].mxu0 %v1251
        %v1321 = vpop.f32.mrb[0].mxu0
        %v1322 = vadd.f32 0.0, %v1321
        %v1323 = vpop.f32.mrb[0].mxu0
        %1324 = vdwg.mxu0
        %v1325 = vmul.f32 %v1322, 0.125
        %v1326 = vsel %vm834, %v1325, -inf
        %1327 = vmax.xlane.f32.xlu0 %v1326
        %v1328 = vpop.xlane.xlu0 %1327
        %v1329 = vsub.f32 %v1325, %v1328
        %v1330 = vmul.f32 %v1329, 1.442695
        %v1331 = vpow.pop %v1330
        %v1332 = vsel %vm834, %v1331, 0.0
        %1333 = vadd.xlane.f32.xlu0 %v1332
        %v1334 = vpop.xlane.xlu0 %1333
        %v1335 = vrcp.pop %v1334
        %v1336 = vmul.f32 %v1331, %v1335
        %1338 = vrot.lane.b32.xlu0 %v683, 64
        %v1339 = vpop.permute.xlu0 %1338
        %v1342 = vsel %vm834, %v1336, 0
        %1344 = vmatprep.subr.mxu0 0.0
        %1345 = vmatpush1.msra.mxu0 %v1339
        %1346 = vmatprep.subr.mxu0 0.0
        %1347 = vmatpush1.msra.mxu0 0.0
        %1348 = vmatprep.subr.mxu0 0.0
        %1349 = vmatpush1.msra.mxu0 0.0
        %1350 = vmatprep.subr.mxu0 0.0
        %1351 = vmatpush1.msra.mxu0 0.0
        %1352 = vmatprep.subr.mxu0 0.0
        %1353 = vmatpush1.msra.mxu0 0.0
        %1354 = vmatprep.subr.mxu0 0.0
        %1355 = vmatpush1.msra.mxu0 0.0
        %1356 = vmatprep.subr.mxu0 0.0
        %1357 = vmatpush1.msra.mxu0 0.0
        %1358 = vmatprep.subr.mxu0 0.0
        %1359 = vmatpush1.msra.mxu0 0.0
        %1360 = vmatprep.subr.mxu0 0.0
        %1361 = vmatpush1.msra.mxu0 0.0
        %1362 = vmatprep.subr.mxu0 0.0
        %1363 = vmatpush1.msra.mxu0 0.0
        %1364 = vmatprep.subr.mxu0 0.0
        %1365 = vmatpush1.msra.mxu0 0.0
        %1366 = vmatprep.subr.mxu0 0.0
        %1367 = vmatpush1.msra.mxu0 0.0
        %1368 = vmatprep.subr.mxu0 0.0
        %1369 = vmatpush1.msra.mxu0 0.0
        %1370 = vmatprep.subr.mxu0 0.0
        %1371 = vmatpush1.msra.mxu0 0.0
        %1372 = vmatprep.subr.mxu0 0.0
        %1373 = vmatpush1.msra.mxu0 0.0
        %1374 = vmatprep.subr.mxu0 0.0
        %1375 = vmatpush1.msra.mxu0 0.0
        %1376 = vmatprep.subr.mxu0 0.0
        %1377 = vmatpush1.msra.mxu0 0.0
        %1378 = vmatprep.subr.mxu0 0.0
        %1379 = vmatpush1.msra.mxu0 0.0
        %1380 = vmatprep.subr.mxu0 0.0
        %1381 = vmatpush1.msra.mxu0 0.0
        %1382 = vmatprep.subr.mxu0 0.0
        %1383 = vmatpush1.msra.mxu0 0.0
        %1384 = vmatprep.subr.mxu0 0.0
        %1385 = vmatpush1.msra.mxu0 0.0
        %1386 = vmatprep.subr.mxu0 0.0
        %1387 = vmatpush1.msra.mxu0 0.0
        %1388 = vmatprep.subr.mxu0 0.0
        %1389 = vmatpush1.msra.mxu0 0.0
        %1390 = vmatprep.subr.mxu0 0.0
        %1391 = vmatpush1.msra.mxu0 0.0
        %1392 = vmatprep.subr.mxu0 0.0
        %1393 = vmatpush1.msra.mxu0 0.0
        %1394 = vmatprep.subr.mxu0 0.0
        %1395 = vmatpush1.msra.mxu0 0.0
        %1396 = vmatprep.subr.mxu0 0.0
        %1397 = vmatpush1.msra.mxu0 0.0
        %1398 = vmatprep.subr.mxu0 0.0
        %1399 = vmatpush1.msra.mxu0 0.0
        %1400 = vmatprep.subr.mxu0 0.0
        %1401 = vmatpush1.msra.mxu0 0.0
        %1402 = vmatprep.subr.mxu0 0.0
        %1403 = vmatpush1.msra.mxu0 0.0
        %1404 = vmatprep.subr.mxu0 0.0
        %1405 = vmatpush1.msra.mxu0 0.0
        %1406 = vmatprep.subr.mxu0 0.0
        %1407 = vmatpush1.msra.mxu0 0.0
        %1408 = vmatprep.mubr.f32.mxu0 0.0
        %1409 = vmatmul.mubr.f32.gmra.mrb[0].mxu0 %v1342
        %v1410 = vpop.f32.mrb[0].mxu0
        %v1411 = vadd.f32 0.0, %v1410
        %v1412 = vpop.f32.mrb[0].mxu0
        %1413 = vdwg.mxu0
        %v1415 = vsel %vm756, %v468, 0
        %v1418 = vsel %vm756, %v610, 0
        %1420 = vmatprep.subr.mxu0 0.0
        %1421 = vmatpush1.xpose.msra.mxu0 %v1418
        %1422 = vmatprep.subr.mxu0 0.0
        %1423 = vmatpush1.xpose.msra.mxu0 0.0
        %1424 = vmatprep.subr.mxu0 0.0
        %1425 = vmatpush1.xpose.msra.mxu0 0.0
        %1426 = vmatprep.subr.mxu0 0.0
        %1427 = vmatpush1.xpose.msra.mxu0 0.0
        %1428 = vmatprep.subr.mxu0 0.0
        %1429 = vmatpush1.xpose.msra.mxu0 0.0
        %1430 = vmatprep.subr.mxu0 0.0
        %1431 = vmatpush1.xpose.msra.mxu0 0.0
        %1432 = vmatprep.subr.mxu0 0.0
        %1433 = vmatpush1.xpose.msra.mxu0 0.0
        %1434 = vmatprep.subr.mxu0 0.0
        %1435 = vmatpush1.xpose.msra.mxu0 0.0
        %1436 = vmatprep.subr.mxu0 0.0
        %1437 = vmatpush1.xpose.msra.mxu0 0.0
        %1438 = vmatprep.subr.mxu0 0.0
        %1439 = vmatpush1.xpose.msra.mxu0 0.0
        %1440 = vmatprep.subr.mxu0 0.0
        %1441 = vmatpush1.xpose.msra.mxu0 0.0
        %1442 = vmatprep.subr.mxu0 0.0
        %1443 = vmatpush1.xpose.msra.mxu0 0.0
        %1444 = vmatprep.subr.mxu0 0.0
        %1445 = vmatpush1.xpose.msra.mxu0 0.0
        %1446 = vmatprep.subr.mxu0 0.0
        %1447 = vmatpush1.xpose.msra.mxu0 0.0
        %1448 = vmatprep.subr.mxu0 0.0
        %1449 = vmatpush1.xpose.msra.mxu0 0.0
        %1450 = vmatprep.subr.mxu0 0.0
        %1451 = vmatpush1.xpose.msra.mxu0 0.0
        %1452 = vmatprep.subr.mxu0 0.0
        %1453 = vmatpush1.xpose.msra.mxu0 0.0
        %1454 = vmatprep.subr.mxu0 0.0
        %1455 = vmatpush1.xpose.msra.mxu0 0.0
        %1456 = vmatprep.subr.mxu0 0.0
        %1457 = vmatpush1.xpose.msra.mxu0 0.0
        %1458 = vmatprep.subr.mxu0 0.0
        %1459 = vmatpush1.xpose.msra.mxu0 0.0
        %1460 = vmatprep.subr.mxu0 0.0
        %1461 = vmatpush1.xpose.msra.mxu0 0.0
        %1462 = vmatprep.subr.mxu0 0.0
        %1463 = vmatpush1.xpose.msra.mxu0 0.0
        %1464 = vmatprep.subr.mxu0 0.0
        %1465 = vmatpush1.xpose.msra.mxu0 0.0
        %1466 = vmatprep.subr.mxu0 0.0
        %1467 = vmatpush1.xpose.msra.mxu0 0.0
        %1468 = vmatprep.subr.mxu0 0.0
        %1469 = vmatpush1.xpose.msra.mxu0 0.0
        %1470 = vmatprep.subr.mxu0 0.0
        %1471 = vmatpush1.xpose.msra.mxu0 0.0
        %1472 = vmatprep.subr.mxu0 0.0
        %1473 = vmatpush1.xpose.msra.mxu0 0.0
        %1474 = vmatprep.subr.mxu0 0.0
        %1475 = vmatpush1.xpose.msra.mxu0 0.0
        %1476 = vmatprep.subr.mxu0 0.0
        %1477 = vmatpush1.xpose.msra.mxu0 0.0
        %1478 = vmatprep.subr.mxu0 0.0
        %1479 = vmatpush1.xpose.msra.mxu0 0.0
        %1480 = vmatprep.subr.mxu0 0.0
        %1481 = vmatpush1.xpose.msra.mxu0 0.0
        %1482 = vmatprep.subr.mxu0 0.0
        %1483 = vmatpush1.xpose.msra.mxu0 0.0
        %1484 = vmatprep.mubr.f32.mxu0 0.0
        %1485 = vmatmul.mubr.f32.gmra.mrb[0].mxu0 %v1415
        %v1486 = vpop.f32.mrb[0].mxu0
        %v1487 = vadd.f32 0.0, %v1486
        %v1488 = vpop.f32.mrb[0].mxu0
        %1489 = vdwg.mxu0
        %v1490 = vmul.f32 %v1487, 0.125
        %v1491 = vsel %vm834, %v1490, -inf
        %1492 = vmax.xlane.f32.xlu0 %v1491
        %v1493 = vpop.xlane.xlu0 %1492
        %v1494 = vsub.f32 %v1490, %v1493
        %v1495 = vmul.f32 %v1494, 1.442695
        %v1496 = vpow.pop %v1495
        %v1497 = vsel %vm834, %v1496, 0.0
        %1498 = vadd.xlane.f32.xlu0 %v1497
        %v1499 = vpop.xlane.xlu0 %1498
        %v1500 = vrcp.pop %v1499
        %v1501 = vmul.f32 %v1496, %v1500
        %v1503 = vsel %vm834, %v1501, 0
        %1505 = vmatprep.subr.mxu0 0.0
        %1506 = vmatpush1.msra.mxu0 %v752
        %1507 = vmatprep.subr.mxu0 0.0
        %1508 = vmatpush1.msra.mxu0 0.0
        %1509 = vmatprep.subr.mxu0 0.0
        %1510 = vmatpush1.msra.mxu0 0.0
        %1511 = vmatprep.subr.mxu0 0.0
        %1512 = vmatpush1.msra.mxu0 0.0
        %1513 = vmatprep.subr.mxu0 0.0
        %1514 = vmatpush1.msra.mxu0 0.0
        %1515 = vmatprep.subr.mxu0 0.0
        %1516 = vmatpush1.msra.mxu0 0.0
        %1517 = vmatprep.subr.mxu0 0.0
        %1518 = vmatpush1.msra.mxu0 0.0
        %1519 = vmatprep.subr.mxu0 0.0
        %1520 = vmatpush1.msra.mxu0 0.0
        %1521 = vmatprep.subr.mxu0 0.0
        %1522 = vmatpush1.msra.mxu0 0.0
        %1523 = vmatprep.subr.mxu0 0.0
        %1524 = vmatpush1.msra.mxu0 0.0
        %1525 = vmatprep.subr.mxu0 0.0
        %1526 = vmatpush1.msra.mxu0 0.0
        %1527 = vmatprep.subr.mxu0 0.0
        %1528 = vmatpush1.msra.mxu0 0.0
        %1529 = vmatprep.subr.mxu0 0.0
        %1530 = vmatpush1.msra.mxu0 0.0
        %1531 = vmatprep.subr.mxu0 0.0
        %1532 = vmatpush1.msra.mxu0 0.0
        %1533 = vmatprep.subr.mxu0 0.0
        %1534 = vmatpush1.msra.mxu0 0.0
        %1535 = vmatprep.subr.mxu0 0.0
        %1536 = vmatpush1.msra.mxu0 0.0
        %1537 = vmatprep.subr.mxu0 0.0
        %1538 = vmatpush1.msra.mxu0 0.0
        %1539 = vmatprep.subr.mxu0 0.0
        %1540 = vmatpush1.msra.mxu0 0.0
        %1541 = vmatprep.subr.mxu0 0.0
        %1542 = vmatpush1.msra.mxu0 0.0
        %1543 = vmatprep.subr.mxu0 0.0
        %1544 = vmatpush1.msra.mxu0 0.0
        %1545 = vmatprep.subr.mxu0 0.0
        %1546 = vmatpush1.msra.mxu0 0.0
        %1547 = vmatprep.subr.mxu0 0.0
        %1548 = vmatpush1.msra.mxu0 0.0
        %1549 = vmatprep.subr.mxu0 0.0
        %1550 = vmatpush1.msra.mxu0 0.0
        %1551 = vmatprep.subr.mxu0 0.0
        %1552 = vmatpush1.msra.mxu0 0.0
        %1553 = vmatprep.subr.mxu0 0.0
        %1554 = vmatpush1.msra.mxu0 0.0
        %1555 = vmatprep.subr.mxu0 0.0
        %1556 = vmatpush1.msra.mxu0 0.0
        %1557 = vmatprep.subr.mxu0 0.0
        %1558 = vmatpush1.msra.mxu0 0.0
        %1559 = vmatprep.subr.mxu0 0.0
        %1560 = vmatpush1.msra.mxu0 0.0
        %1561 = vmatprep.subr.mxu0 0.0
        %1562 = vmatpush1.msra.mxu0 0.0
        %1563 = vmatprep.subr.mxu0 0.0
        %1564 = vmatpush1.msra.mxu0 0.0
        %1565 = vmatprep.subr.mxu0 0.0
        %1566 = vmatpush1.msra.mxu0 0.0
        %1567 = vmatprep.subr.mxu0 0.0
        %1568 = vmatpush1.msra.mxu0 0.0
        %1569 = vmatprep.mubr.f32.mxu0 0.0
        %1570 = vmatmul.mubr.f32.gmra.mrb[0].mxu0 %v1503
        %v1571 = vpop.f32.mrb[0].mxu0
        %v1572 = vadd.f32 0.0, %v1571
        %v1573 = vpop.f32.mrb[0].mxu0
        %1574 = vdwg.mxu0
        %1575 = vrot.lane.b32.xlu0 %v468, 64
        %v1576 = vpop.permute.xlu0 %1575
        %1577 = vrot.lane.b32.xlu0 %v610, 64
        %v1578 = vpop.permute.xlu0 %1577
        %v1579 = vsel %vm756, %v1576, 0
        %v1581 = vsel %vm756, %v1578, 0
        %1583 = vmatprep.subr.mxu0 0.0
        %1584 = vmatpush1.xpose.msra.mxu0 %v1581
        %1585 = vmatprep.subr.mxu0 0.0
        %1586 = vmatpush1.xpose.msra.mxu0 0.0
        %1587 = vmatprep.subr.mxu0 0.0
        %1588 = vmatpush1.xpose.msra.mxu0 0.0
        %1589 = vmatprep.subr.mxu0 0.0
        %1590 = vmatpush1.xpose.msra.mxu0 0.0
        %1591 = vmatprep.subr.mxu0 0.0
        %1592 = vmatpush1.xpose.msra.mxu0 0.0
        %1593 = vmatprep.subr.mxu0 0.0
        %1594 = vmatpush1.xpose.msra.mxu0 0.0
        %1595 = vmatprep.subr.mxu0 0.0
        %1596 = vmatpush1.xpose.msra.mxu0 0.0
        %1597 = vmatprep.subr.mxu0 0.0
        %1598 = vmatpush1.xpose.msra.mxu0 0.0
        %1599 = vmatprep.subr.mxu0 0.0
        %1600 = vmatpush1.xpose.msra.mxu0 0.0
        %1601 = vmatprep.subr.mxu0 0.0
        %1602 = vmatpush1.xpose.msra.mxu0 0.0
        %1603 = vmatprep.subr.mxu0 0.0
        %1604 = vmatpush1.xpose.msra.mxu0 0.0
        %1605 = vmatprep.subr.mxu0 0.0
        %1606 = vmatpush1.xpose.msra.mxu0 0.0
        %1607 = vmatprep.subr.mxu0 0.0
        %1608 = vmatpush1.xpose.msra.mxu0 0.0
        %1609 = vmatprep.subr.mxu0 0.0
        %1610 = vmatpush1.xpose.msra.mxu0 0.0
        %1611 = vmatprep.subr.mxu0 0.0
        %1612 = vmatpush1.xpose.msra.mxu0 0.0
        %1613 = vmatprep.subr.mxu0 0.0
        %1614 = vmatpush1.xpose.msra.mxu0 0.0
        %1615 = vmatprep.subr.mxu0 0.0
        %1616 = vmatpush1.xpose.msra.mxu0 0.0
        %1617 = vmatprep.subr.mxu0 0.0
        %1618 = vmatpush1.xpose.msra.mxu0 0.0
        %1619 = vmatprep.subr.mxu0 0.0
        %1620 = vmatpush1.xpose.msra.mxu0 0.0
        %1621 = vmatprep.subr.mxu0 0.0
        %1622 = vmatpush1.xpose.msra.mxu0 0.0
        %1623 = vmatprep.subr.mxu0 0.0
        %1624 = vmatpush1.xpose.msra.mxu0 0.0
        %1625 = vmatprep.subr.mxu0 0.0
        %1626 = vmatpush1.xpose.msra.mxu0 0.0
        %1627 = vmatprep.subr.mxu0 0.0
        %1628 = vmatpush1.xpose.msra.mxu0 0.0
        %1629 = vmatprep.subr.mxu0 0.0
        %1630 = vmatpush1.xpose.msra.mxu0 0.0
        %1631 = vmatprep.subr.mxu0 0.0
        %1632 = vmatpush1.xpose.msra.mxu0 0.0
        %1633 = vmatprep.subr.mxu0 0.0
        %1634 = vmatpush1.xpose.msra.mxu0 0.0
        %1635 = vmatprep.subr.mxu0 0.0
        %1636 = vmatpush1.xpose.msra.mxu0 0.0
        %1637 = vmatprep.subr.mxu0 0.0
        %1638 = vmatpush1.xpose.msra.mxu0 0.0
        %1639 = vmatprep.subr.mxu0 0.0
        %1640 = vmatpush1.xpose.msra.mxu0 0.0
        %1641 = vmatprep.subr.mxu0 0.0
        %1642 = vmatpush1.xpose.msra.mxu0 0.0
        %1643 = vmatprep.subr.mxu0 0.0
        %1644 = vmatpush1.xpose.msra.mxu0 0.0
        %1645 = vmatprep.subr.mxu0 0.0
        %1646 = vmatpush1.xpose.msra.mxu0 0.0
        %1647 = vmatprep.mubr.f32.mxu0 0.0
        %1648 = vmatmul.mubr.f32.gmra.mrb[0].mxu0 %v1579
        %v1649 = vpop.f32.mrb[0].mxu0
        %v1650 = vadd.f32 0.0, %v1649
        %v1651 = vpop.f32.mrb[0].mxu0
        %1652 = vdwg.mxu0
        %v1653 = vmul.f32 %v1650, 0.125
        %v1654 = vsel %vm834, %v1653, -inf
        %1655 = vmax.xlane.f32.xlu0 %v1654
        %v1656 = vpop.xlane.xlu0 %1655
        %v1657 = vsub.f32 %v1653, %v1656
        %v1658 = vmul.f32 %v1657, 1.442695
        %v1659 = vpow.pop %v1658
        %v1660 = vsel %vm834, %v1659, 0.0
        %1661 = vadd.xlane.f32.xlu0 %v1660
        %v1662 = vpop.xlane.xlu0 %1661
        %v1663 = vrcp.pop %v1662
        %v1664 = vmul.f32 %v1659, %v1663
        %1666 = vrot.lane.b32.xlu0 %v752, 64
        %v1667 = vpop.permute.xlu0 %1666
        %v1670 = vsel %vm834, %v1664, 0
        %1672 = vmatprep.subr.mxu0 0.0
        %1673 = vmatpush1.msra.mxu0 %v1667
        %1674 = vmatprep.subr.mxu0 0.0
        %1675 = vmatpush1.msra.mxu0 0.0
        %1676 = vmatprep.subr.mxu0 0.0
        %1677 = vmatpush1.msra.mxu0 0.0
        %1678 = vmatprep.subr.mxu0 0.0
        %1679 = vmatpush1.msra.mxu0 0.0
        %1680 = vmatprep.subr.mxu0 0.0
        %1681 = vmatpush1.msra.mxu0 0.0
        %1682 = vmatprep.subr.mxu0 0.0
        %1683 = vmatpush1.msra.mxu0 0.0
        %1684 = vmatprep.subr.mxu0 0.0
        %1685 = vmatpush1.msra.mxu0 0.0
        %1686 = vmatprep.subr.mxu0 0.0
        %1687 = vmatpush1.msra.mxu0 0.0
        %1688 = vmatprep.subr.mxu0 0.0
        %1689 = vmatpush1.msra.mxu0 0.0
        %1690 = vmatprep.subr.mxu0 0.0
        %1691 = vmatpush1.msra.mxu0 0.0
        %1692 = vmatprep.subr.mxu0 0.0
        %1693 = vmatpush1.msra.mxu0 0.0
        %1694 = vmatprep.subr.mxu0 0.0
        %1695 = vmatpush1.msra.mxu0 0.0
        %1696 = vmatprep.subr.mxu0 0.0
        %1697 = vmatpush1.msra.mxu0 0.0
        %1698 = vmatprep.subr.mxu0 0.0
        %1699 = vmatpush1.msra.mxu0 0.0
        %1700 = vmatprep.subr.mxu0 0.0
        %1701 = vmatpush1.msra.mxu0 0.0
        %1702 = vmatprep.subr.mxu0 0.0
        %1703 = vmatpush1.msra.mxu0 0.0
        %1704 = vmatprep.subr.mxu0 0.0
        %1705 = vmatpush1.msra.mxu0 0.0
        %1706 = vmatprep.subr.mxu0 0.0
        %1707 = vmatpush1.msra.mxu0 0.0
        %1708 = vmatprep.subr.mxu0 0.0
        %1709 = vmatpush1.msra.mxu0 0.0
        %1710 = vmatprep.subr.mxu0 0.0
        %1711 = vmatpush1.msra.mxu0 0.0
        %1712 = vmatprep.subr.mxu0 0.0
        %1713 = vmatpush1.msra.mxu0 0.0
        %1714 = vmatprep.subr.mxu0 0.0
        %1715 = vmatpush1.msra.mxu0 0.0
        %1716 = vmatprep.subr.mxu0 0.0
        %1717 = vmatpush1.msra.mxu0 0.0
        %1718 = vmatprep.subr.mxu0 0.0
        %1719 = vmatpush1.msra.mxu0 0.0
        %1720 = vmatprep.subr.mxu0 0.0
        %1721 = vmatpush1.msra.mxu0 0.0
        %1722 = vmatprep.subr.mxu0 0.0
        %1723 = vmatpush1.msra.mxu0 0.0
        %1724 = vmatprep.subr.mxu0 0.0
        %1725 = vmatpush1.msra.mxu0 0.0
        %1726 = vmatprep.subr.mxu0 0.0
        %1727 = vmatpush1.msra.mxu0 0.0
        %1728 = vmatprep.subr.mxu0 0.0
        %1729 = vmatpush1.msra.mxu0 0.0
        %1730 = vmatprep.subr.mxu0 0.0
        %1731 = vmatpush1.msra.mxu0 0.0
        %1732 = vmatprep.subr.mxu0 0.0
        %1733 = vmatpush1.msra.mxu0 0.0
        %1734 = vmatprep.subr.mxu0 0.0
        %1735 = vmatpush1.msra.mxu0 0.0
        %1736 = vmatprep.mubr.f32.mxu0 0.0
        %1737 = vmatmul.mubr.f32.gmra.mrb[0].mxu0 %v1670
        %v1738 = vpop.f32.mrb[0].mxu0
        %v1739 = vadd.f32 0.0, %v1738
        %v1740 = vpop.f32.mrb[0].mxu0
        %1741 = vdwg.mxu0
        %v1743 = vsel %vm756, %v470, 0
        %v1746 = vsel %vm756, %v612, 0
        %1748 = vmatprep.subr.mxu0 0.0
        %1749 = vmatpush1.xpose.msra.mxu0 %v1746
        %1750 = vmatprep.subr.mxu0 0.0
        %1751 = vmatpush1.xpose.msra.mxu0 0.0
        %1752 = vmatprep.subr.mxu0 0.0
        %1753 = vmatpush1.xpose.msra.mxu0 0.0
        %1754 = vmatprep.subr.mxu0 0.0
        %1755 = vmatpush1.xpose.msra.mxu0 0.0
        %1756 = vmatprep.subr.mxu0 0.0
        %1757 = vmatpush1.xpose.msra.mxu0 0.0
        %1758 = vmatprep.subr.mxu0 0.0
        %1759 = vmatpush1.xpose.msra.mxu0 0.0
        %1760 = vmatprep.subr.mxu0 0.0
        %1761 = vmatpush1.xpose.msra.mxu0 0.0
        %1762 = vmatprep.subr.mxu0 0.0
        %1763 = vmatpush1.xpose.msra.mxu0 0.0
        %1764 = vmatprep.subr.mxu0 0.0
        %1765 = vmatpush1.xpose.msra.mxu0 0.0
        %1766 = vmatprep.subr.mxu0 0.0
        %1767 = vmatpush1.xpose.msra.mxu0 0.0
        %1768 = vmatprep.subr.mxu0 0.0
        %1769 = vmatpush1.xpose.msra.mxu0 0.0
        %1770 = vmatprep.subr.mxu0 0.0
        %1771 = vmatpush1.xpose.msra.mxu0 0.0
        %1772 = vmatprep.subr.mxu0 0.0
        %1773 = vmatpush1.xpose.msra.mxu0 0.0
        %1774 = vmatprep.subr.mxu0 0.0
        %1775 = vmatpush1.xpose.msra.mxu0 0.0
        %1776 = vmatprep.subr.mxu0 0.0
        %1777 = vmatpush1.xpose.msra.mxu0 0.0
        %1778 = vmatprep.subr.mxu0 0.0
        %1779 = vmatpush1.xpose.msra.mxu0 0.0
        %1780 = vmatprep.subr.mxu0 0.0
        %1781 = vmatpush1.xpose.msra.mxu0 0.0
        %1782 = vmatprep.subr.mxu0 0.0
        %1783 = vmatpush1.xpose.msra.mxu0 0.0
        %1784 = vmatprep.subr.mxu0 0.0
        %1785 = vmatpush1.xpose.msra.mxu0 0.0
        %1786 = vmatprep.subr.mxu0 0.0
        %1787 = vmatpush1.xpose.msra.mxu0 0.0
        %1788 = vmatprep.subr.mxu0 0.0
        %1789 = vmatpush1.xpose.msra.mxu0 0.0
        %1790 = vmatprep.subr.mxu0 0.0
        %1791 = vmatpush1.xpose.msra.mxu0 0.0
        %1792 = vmatprep.subr.mxu0 0.0
        %1793 = vmatpush1.xpose.msra.mxu0 0.0
        %1794 = vmatprep.subr.mxu0 0.0
        %1795 = vmatpush1.xpose.msra.mxu0 0.0
        %1796 = vmatprep.subr.mxu0 0.0
        %1797 = vmatpush1.xpose.msra.mxu0 0.0
        %1798 = vmatprep.subr.mxu0 0.0
        %1799 = vmatpush1.xpose.msra.mxu0 0.0
        %1800 = vmatprep.subr.mxu0 0.0
        %1801 = vmatpush1.xpose.msra.mxu0 0.0
        %1802 = vmatprep.subr.mxu0 0.0
        %1803 = vmatpush1.xpose.msra.mxu0 0.0
        %1804 = vmatprep.subr.mxu0 0.0
        %1805 = vmatpush1.xpose.msra.mxu0 0.0
        %1806 = vmatprep.subr.mxu0 0.0
        %1807 = vmatpush1.xpose.msra.mxu0 0.0
        %1808 = vmatprep.subr.mxu0 0.0
        %1809 = vmatpush1.xpose.msra.mxu0 0.0
        %1810 = vmatprep.subr.mxu0 0.0
        %1811 = vmatpush1.xpose.msra.mxu0 0.0
        %1812 = vmatprep.mubr.f32.mxu0 0.0
        %1813 = vmatmul.mubr.f32.gmra.mrb[0].mxu0 %v1743
        %v1814 = vpop.f32.mrb[0].mxu0
        %v1815 = vadd.f32 0.0, %v1814
        %v1816 = vpop.f32.mrb[0].mxu0
        %1817 = vdwg.mxu0
        %v1818 = vmul.f32 %v1815, 0.125
        %v1819 = vsel %vm834, %v1818, -inf
        %1820 = vmax.xlane.f32.xlu0 %v1819
        %v1821 = vpop.xlane.xlu0 %1820
        %v1822 = vsub.f32 %v1818, %v1821
        %v1823 = vmul.f32 %v1822, 1.442695
        %v1824 = vpow.pop %v1823
        %v1825 = vsel %vm834, %v1824, 0.0
        %1826 = vadd.xlane.f32.xlu0 %v1825
        %v1827 = vpop.xlane.xlu0 %1826
        %v1828 = vrcp.pop %v1827
        %v1829 = vmul.f32 %v1824, %v1828
        %v1831 = vsel %vm834, %v1829, 0
        %1833 = vmatprep.subr.mxu0 0.0
        %1834 = vmatpush1.msra.mxu0 %v754
        %1835 = vmatprep.subr.mxu0 0.0
        %1836 = vmatpush1.msra.mxu0 0.0
        %1837 = vmatprep.subr.mxu0 0.0
        %1838 = vmatpush1.msra.mxu0 0.0
        %1839 = vmatprep.subr.mxu0 0.0
        %1840 = vmatpush1.msra.mxu0 0.0
        %1841 = vmatprep.subr.mxu0 0.0
        %1842 = vmatpush1.msra.mxu0 0.0
        %1843 = vmatprep.subr.mxu0 0.0
        %1844 = vmatpush1.msra.mxu0 0.0
        %1845 = vmatprep.subr.mxu0 0.0
        %1846 = vmatpush1.msra.mxu0 0.0
        %1847 = vmatprep.subr.mxu0 0.0
        %1848 = vmatpush1.msra.mxu0 0.0
        %1849 = vmatprep.subr.mxu0 0.0
        %1850 = vmatpush1.msra.mxu0 0.0
        %1851 = vmatprep.subr.mxu0 0.0
        %1852 = vmatpush1.msra.mxu0 0.0
        %1853 = vmatprep.subr.mxu0 0.0
        %1854 = vmatpush1.msra.mxu0 0.0
        %1855 = vmatprep.subr.mxu0 0.0
        %1856 = vmatpush1.msra.mxu0 0.0
        %1857 = vmatprep.subr.mxu0 0.0
        %1858 = vmatpush1.msra.mxu0 0.0
        %1859 = vmatprep.subr.mxu0 0.0
        %1860 = vmatpush1.msra.mxu0 0.0
        %1861 = vmatprep.subr.mxu0 0.0
        %1862 = vmatpush1.msra.mxu0 0.0
        %1863 = vmatprep.subr.mxu0 0.0
        %1864 = vmatpush1.msra.mxu0 0.0
        %1865 = vmatprep.subr.mxu0 0.0
        %1866 = vmatpush1.msra.mxu0 0.0
        %1867 = vmatprep.subr.mxu0 0.0
        %1868 = vmatpush1.msra.mxu0 0.0
        %1869 = vmatprep.subr.mxu0 0.0
        %1870 = vmatpush1.msra.mxu0 0.0
        %1871 = vmatprep.subr.mxu0 0.0
        %1872 = vmatpush1.msra.mxu0 0.0
        %1873 = vmatprep.subr.mxu0 0.0
        %1874 = vmatpush1.msra.mxu0 0.0
        %1875 = vmatprep.subr.mxu0 0.0
        %1876 = vmatpush1.msra.mxu0 0.0
        %1877 = vmatprep.subr.mxu0 0.0
        %1878 = vmatpush1.msra.mxu0 0.0
        %1879 = vmatprep.subr.mxu0 0.0
        %1880 = vmatpush1.msra.mxu0 0.0
        %1881 = vmatprep.subr.mxu0 0.0
        %1882 = vmatpush1.msra.mxu0 0.0
        %1883 = vmatprep.subr.mxu0 0.0
        %1884 = vmatpush1.msra.mxu0 0.0
        %1885 = vmatprep.subr.mxu0 0.0
        %1886 = vmatpush1.msra.mxu0 0.0
        %1887 = vmatprep.subr.mxu0 0.0
        %1888 = vmatpush1.msra.mxu0 0.0
        %1889 = vmatprep.subr.mxu0 0.0
        %1890 = vmatpush1.msra.mxu0 0.0
        %1891 = vmatprep.subr.mxu0 0.0
        %1892 = vmatpush1.msra.mxu0 0.0
        %1893 = vmatprep.subr.mxu0 0.0
        %1894 = vmatpush1.msra.mxu0 0.0
        %1895 = vmatprep.subr.mxu0 0.0
        %1896 = vmatpush1.msra.mxu0 0.0
        %1897 = vmatprep.mubr.f32.mxu0 0.0
        %1898 = vmatmul.mubr.f32.gmra.mrb[0].mxu0 %v1831
        %v1899 = vpop.f32.mrb[0].mxu0
        %v1900 = vadd.f32 0.0, %v1899
        %v1901 = vpop.f32.mrb[0].mxu0
        %1902 = vdwg.mxu0
        %1903 = vrot.lane.b32.xlu0 %v470, 64
        %v1904 = vpop.permute.xlu0 %1903
        %1905 = vrot.lane.b32.xlu0 %v612, 64
        %v1906 = vpop.permute.xlu0 %1905
        %v1907 = vsel %vm756, %v1904, 0
        %v1909 = vsel %vm756, %v1906, 0
        %1911 = vmatprep.subr.mxu0 0.0
        %1912 = vmatpush1.xpose.msra.mxu0 %v1909
        %1913 = vmatprep.subr.mxu0 0.0
        %1914 = vmatpush1.xpose.msra.mxu0 0.0
        %1915 = vmatprep.subr.mxu0 0.0
        %1916 = vmatpush1.xpose.msra.mxu0 0.0
        %1917 = vmatprep.subr.mxu0 0.0
        %1918 = vmatpush1.xpose.msra.mxu0 0.0
        %1919 = vmatprep.subr.mxu0 0.0
        %1920 = vmatpush1.xpose.msra.mxu0 0.0
        %1921 = vmatprep.subr.mxu0 0.0
        %1922 = vmatpush1.xpose.msra.mxu0 0.0
        %1923 = vmatprep.subr.mxu0 0.0
        %1924 = vmatpush1.xpose.msra.mxu0 0.0
        %1925 = vmatprep.subr.mxu0 0.0
        %1926 = vmatpush1.xpose.msra.mxu0 0.0
        %1927 = vmatprep.subr.mxu0 0.0
        %1928 = vmatpush1.xpose.msra.mxu0 0.0
        %1929 = vmatprep.subr.mxu0 0.0
        %1930 = vmatpush1.xpose.msra.mxu0 0.0
        %1931 = vmatprep.subr.mxu0 0.0
        %1932 = vmatpush1.xpose.msra.mxu0 0.0
        %1933 = vmatprep.subr.mxu0 0.0
        %1934 = vmatpush1.xpose.msra.mxu0 0.0
        %1935 = vmatprep.subr.mxu0 0.0
        %1936 = vmatpush1.xpose.msra.mxu0 0.0
        %1937 = vmatprep.subr.mxu0 0.0
        %1938 = vmatpush1.xpose.msra.mxu0 0.0
        %1939 = vmatprep.subr.mxu0 0.0
        %1940 = vmatpush1.xpose.msra.mxu0 0.0
        %1941 = vmatprep.subr.mxu0 0.0
        %1942 = vmatpush1.xpose.msra.mxu0 0.0
        %1943 = vmatprep.subr.mxu0 0.0
        %1944 = vmatpush1.xpose.msra.mxu0 0.0
        %1945 = vmatprep.subr.mxu0 0.0
        %1946 = vmatpush1.xpose.msra.mxu0 0.0
        %1947 = vmatprep.subr.mxu0 0.0
        %1948 = vmatpush1.xpose.msra.mxu0 0.0
        %1949 = vmatprep.subr.mxu0 0.0
        %1950 = vmatpush1.xpose.msra.mxu0 0.0
        %1951 = vmatprep.subr.mxu0 0.0
        %1952 = vmatpush1.xpose.msra.mxu0 0.0
        %1953 = vmatprep.subr.mxu0 0.0
        %1954 = vmatpush1.xpose.msra.mxu0 0.0
        %1955 = vmatprep.subr.mxu0 0.0
        %1956 = vmatpush1.xpose.msra.mxu0 0.0
        %1957 = vmatprep.subr.mxu0 0.0
        %1958 = vmatpush1.xpose.msra.mxu0 0.0
        %1959 = vmatprep.subr.mxu0 0.0
        %1960 = vmatpush1.xpose.msra.mxu0 0.0
        %1961 = vmatprep.subr.mxu0 0.0
        %1962 = vmatpush1.xpose.msra.mxu0 0.0
        %1963 = vmatprep.subr.mxu0 0.0
        %1964 = vmatpush1.xpose.msra.mxu0 0.0
        %1965 = vmatprep.subr.mxu0 0.0
        %1966 = vmatpush1.xpose.msra.mxu0 0.0
        %1967 = vmatprep.subr.mxu0 0.0
        %1968 = vmatpush1.xpose.msra.mxu0 0.0
        %1969 = vmatprep.subr.mxu0 0.0
        %1970 = vmatpush1.xpose.msra.mxu0 0.0
        %1971 = vmatprep.subr.mxu0 0.0
        %1972 = vmatpush1.xpose.msra.mxu0 0.0
        %1973 = vmatprep.subr.mxu0 0.0
        %1974 = vmatpush1.xpose.msra.mxu0 0.0
        %1975 = vmatprep.mubr.f32.mxu0 0.0
        %1976 = vmatmul.mubr.f32.gmra.mrb[0].mxu0 %v1907
        %v1977 = vpop.f32.mrb[0].mxu0
        %v1978 = vadd.f32 0.0, %v1977
        %v1979 = vpop.f32.mrb[0].mxu0
        %1980 = vdwg.mxu0
        %v1981 = vmul.f32 %v1978, 0.125
        %v1982 = vsel %vm834, %v1981, -inf
        %1983 = vmax.xlane.f32.xlu0 %v1982
        %v1984 = vpop.xlane.xlu0 %1983
        %v1985 = vsub.f32 %v1981, %v1984
        %v1986 = vmul.f32 %v1985, 1.442695
        %v1987 = vpow.pop %v1986
        %v1988 = vsel %vm834, %v1987, 0.0
        %1989 = vadd.xlane.f32.xlu0 %v1988
        %v1990 = vpop.xlane.xlu0 %1989
        %v1991 = vrcp.pop %v1990
        %v1992 = vmul.f32 %v1987, %v1991
        %1994 = vrot.lane.b32.xlu0 %v754, 64
        %v1995 = vpop.permute.xlu0 %1994
        %v1998 = vsel %vm834, %v1992, 0
        %2000 = vmatprep.subr.mxu0 0.0
        %2001 = vmatpush1.msra.mxu0 %v1995
        %2002 = vmatprep.subr.mxu0 0.0
        %2003 = vmatpush1.msra.mxu0 0.0
        %2004 = vmatprep.subr.mxu0 0.0
        %2005 = vmatpush1.msra.mxu0 0.0
        %2006 = vmatprep.subr.mxu0 0.0
        %2007 = vmatpush1.msra.mxu0 0.0
        %2008 = vmatprep.subr.mxu0 0.0
        %2009 = vmatpush1.msra.mxu0 0.0
        %2010 = vmatprep.subr.mxu0 0.0
        %2011 = vmatpush1.msra.mxu0 0.0
        %2012 = vmatprep.subr.mxu0 0.0
        %2013 = vmatpush1.msra.mxu0 0.0
        %2014 = vmatprep.subr.mxu0 0.0
        %2015 = vmatpush1.msra.mxu0 0.0
        %2016 = vmatprep.subr.mxu0 0.0
        %2017 = vmatpush1.msra.mxu0 0.0
        %2018 = vmatprep.subr.mxu0 0.0
        %2019 = vmatpush1.msra.mxu0 0.0
        %2020 = vmatprep.subr.mxu0 0.0
        %2021 = vmatpush1.msra.mxu0 0.0
        %2022 = vmatprep.subr.mxu0 0.0
        %2023 = vmatpush1.msra.mxu0 0.0
        %2024 = vmatprep.subr.mxu0 0.0
        %2025 = vmatpush1.msra.mxu0 0.0
        %2026 = vmatprep.subr.mxu0 0.0
        %2027 = vmatpush1.msra.mxu0 0.0
        %2028 = vmatprep.subr.mxu0 0.0
        %2029 = vmatpush1.msra.mxu0 0.0
        %2030 = vmatprep.subr.mxu0 0.0
        %2031 = vmatpush1.msra.mxu0 0.0
        %2032 = vmatprep.subr.mxu0 0.0
        %2033 = vmatpush1.msra.mxu0 0.0
        %2034 = vmatprep.subr.mxu0 0.0
        %2035 = vmatpush1.msra.mxu0 0.0
        %2036 = vmatprep.subr.mxu0 0.0
        %2037 = vmatpush1.msra.mxu0 0.0
        %2038 = vmatprep.subr.mxu0 0.0
        %2039 = vmatpush1.msra.mxu0 0.0
        %2040 = vmatprep.subr.mxu0 0.0
        %2041 = vmatpush1.msra.mxu0 0.0
        %2042 = vmatprep.subr.mxu0 0.0
        %2043 = vmatpush1.msra.mxu0 0.0
        %2044 = vmatprep.subr.mxu0 0.0
        %2045 = vmatpush1.msra.mxu0 0.0
        %2046 = vmatprep.subr.mxu0 0.0
        %2047 = vmatpush1.msra.mxu0 0.0
        %2048 = vmatprep.subr.mxu0 0.0
        %2049 = vmatpush1.msra.mxu0 0.0
        %2050 = vmatprep.subr.mxu0 0.0
        %2051 = vmatpush1.msra.mxu0 0.0
        %2052 = vmatprep.subr.mxu0 0.0
        %2053 = vmatpush1.msra.mxu0 0.0
        %2054 = vmatprep.subr.mxu0 0.0
        %2055 = vmatpush1.msra.mxu0 0.0
        %2056 = vmatprep.subr.mxu0 0.0
        %2057 = vmatpush1.msra.mxu0 0.0
        %2058 = vmatprep.subr.mxu0 0.0
        %2059 = vmatpush1.msra.mxu0 0.0
        %2060 = vmatprep.subr.mxu0 0.0
        %2061 = vmatpush1.msra.mxu0 0.0
        %2062 = vmatprep.subr.mxu0 0.0
        %2063 = vmatpush1.msra.mxu0 0.0
        %2064 = vmatprep.mubr.f32.mxu0 0.0
        %2065 = vmatmul.mubr.f32.gmra.mrb[0].mxu0 %v1998
        %v2066 = vpop.f32.mrb[0].mxu0
        %v2067 = vadd.f32 0.0, %v2066
        %v2068 = vpop.f32.mrb[0].mxu0
        %2069 = vdwg.mxu0
        %2071 = vrot.lane.b32.xlu0 %v1083, 64
        %v2072 = vpop.permute.xlu0 %2071
        %2075 = vrot.lane.b32.xlu0 %v1411, 64
        %v2076 = vpop.permute.xlu0 %2075
        %2079 = vrot.lane.b32.xlu0 %v1739, 64
        %v2080 = vpop.permute.xlu0 %2079
        %2083 = vrot.lane.b32.xlu0 %v2067, 64
        %v2084 = vpop.permute.xlu0 %2083
        %v2086 = vsel %vm756, %v916, %v2072
        %v2087 = vsel %vm756, %v1244, %v2076
        %v2088 = vsel %vm756, %v1572, %v2080
        %v2089 = vsel %vm756, %v1900, %v2084
        %v2090 = vld [vmem:[%s4] sm:$0xff]
        %v2091 = vld [vmem:[%s4 + $0x8] sm:$0xff]
        %v2092 = vld [vmem:[%s4 + $0x10] sm:$0xff]
        %v2093 = vld [vmem:[%s4 + $0x18] sm:$0xff]
        %v2094 = vld [vmem:[%s4 + $0x20] sm:$0xff]
        %v2095 = vld [vmem:[%s4 + $0x28] sm:$0xff]
        %v2096 = vld [vmem:[%s4 + $0x30] sm:$0xff]
        %v2097 = vld [vmem:[%s4 + $0x38] sm:$0xff]
        %v2098 = vld [vmem:[%s4 + $0x40] sm:$0xff]
        %v2099 = vld [vmem:[%s4 + $0x48] sm:$0xff]
        %v2100 = vld [vmem:[%s4 + $0x50] sm:$0xff]
        %v2101 = vld [vmem:[%s4 + $0x58] sm:$0xff]
        %v2102 = vld [vmem:[%s4 + $0x60] sm:$0xff]
        %v2103 = vld [vmem:[%s4 + $0x68] sm:$0xff]
        %v2104 = vld [vmem:[%s4 + $0x70] sm:$0xff]
        %v2105 = vld [vmem:[%s4 + $0x78] sm:$0xff]
        %v2106 = vld [vmem:[%s4 + $0x80] sm:$0xff]
        %v2107 = vld [vmem:[%s4 + $0x88] sm:$0xff]
        %v2108 = vld [vmem:[%s4 + $0x90] sm:$0xff]
        %v2109 = vld [vmem:[%s4 + $0x98] sm:$0xff]
        %v2110 = vld [vmem:[%s4 + $0xa0] sm:$0xff]
        %v2111 = vld [vmem:[%s4 + $0xa8] sm:$0xff]
        %v2112 = vld [vmem:[%s4 + $0xb0] sm:$0xff]
        %v2113 = vld [vmem:[%s4 + $0xb8] sm:$0xff]
        %v2114 = vld [vmem:[%s4 + $0xc0] sm:$0xff]
        %v2115 = vld [vmem:[%s4 + $0xc8] sm:$0xff]
        %v2116 = vld [vmem:[%s4 + $0xd0] sm:$0xff]
        %v2117 = vld [vmem:[%s4 + $0xd8] sm:$0xff]
        %v2118 = vld [vmem:[%s4 + $0xe0] sm:$0xff]
        %v2119 = vld [vmem:[%s4 + $0xe8] sm:$0xff]
        %v2120 = vld [vmem:[%s4 + $0xf0] sm:$0xff]
        %v2121 = vld [vmem:[%s4 + $0xf8] sm:$0xff]
        %v2122 = vld [vmem:[%s4 + $0x100] sm:$0xff]
        %v2123 = vld [vmem:[%s4 + $0x108] sm:$0xff]
        %v2124 = vld [vmem:[%s4 + $0x110] sm:$0xff]
        %v2125 = vld [vmem:[%s4 + $0x118] sm:$0xff]
        %v2126 = vld [vmem:[%s4 + $0x120] sm:$0xff]
        %v2127 = vld [vmem:[%s4 + $0x128] sm:$0xff]
        %v2128 = vld [vmem:[%s4 + $0x130] sm:$0xff]
        %v2129 = vld [vmem:[%s4 + $0x138] sm:$0xff]
        %v2130 = vld [vmem:[%s4 + $0x140] sm:$0xff]
        %v2131 = vld [vmem:[%s4 + $0x148] sm:$0xff]
        %v2132 = vld [vmem:[%s4 + $0x150] sm:$0xff]
        %v2133 = vld [vmem:[%s4 + $0x158] sm:$0xff]
        %v2134 = vld [vmem:[%s4 + $0x160] sm:$0xff]
        %v2135 = vld [vmem:[%s4 + $0x168] sm:$0xff]
        %v2136 = vld [vmem:[%s4 + $0x170] sm:$0xff]
        %v2137 = vld [vmem:[%s4 + $0x178] sm:$0xff]
        %v2138 = vld [vmem:[%s4 + $0x180] sm:$0xff]
        %v2139 = vld [vmem:[%s4 + $0x188] sm:$0xff]
        %v2140 = vld [vmem:[%s4 + $0x190] sm:$0xff]
        %v2141 = vld [vmem:[%s4 + $0x198] sm:$0xff]
        %v2142 = vld [vmem:[%s4 + $0x1a0] sm:$0xff]
        %v2143 = vld [vmem:[%s4 + $0x1a8] sm:$0xff]
        %v2144 = vld [vmem:[%s4 + $0x1b0] sm:$0xff]
        %v2145 = vld [vmem:[%s4 + $0x1b8] sm:$0xff]
        %v2146 = vld [vmem:[%s4 + $0x1c0] sm:$0xff]
        %v2147 = vld [vmem:[%s4 + $0x1c8] sm:$0xff]
        %v2148 = vld [vmem:[%s4 + $0x1d0] sm:$0xff]
        %v2149 = vld [vmem:[%s4 + $0x1d8] sm:$0xff]
        %v2150 = vld [vmem:[%s4 + $0x1e0] sm:$0xff]
        %v2151 = vld [vmem:[%s4 + $0x1e8] sm:$0xff]
        %v2152 = vld [vmem:[%s4 + $0x1f0] sm:$0xff]
        %v2153 = vld [vmem:[%s4 + $0x1f8] sm:$0xff]
        %v2154 = vld [vmem:[%s5] sm:$0x1]
        %v2156 = vlaneseq
        %v2157 = vshrl.u32 %v2156, 7
        %v2158 = vsub.s32 0, %v2157
        %v2159 = vrot.slane %v2154, %v2158
        %2161 = vmatprep.subr.mxu0 0.0
        %2162 = vmatpush1.msra.mxu0 %v2090
        %2163 = vmatprep.subr.mxu0 0.0
        %2164 = vmatpush1.msra.mxu0 %v2091
        %2165 = vmatprep.subr.mxu0 0.0
        %2166 = vmatpush1.msra.mxu0 %v2092
        %2167 = vmatprep.subr.mxu0 0.0
        %2168 = vmatpush1.msra.mxu0 %v2093
        %2169 = vmatprep.subr.mxu0 0.0
        %2170 = vmatpush1.msra.mxu0 %v2094
        %2171 = vmatprep.subr.mxu0 0.0
        %2172 = vmatpush1.msra.mxu0 %v2095
        %2173 = vmatprep.subr.mxu0 0.0
        %2174 = vmatpush1.msra.mxu0 %v2096
        %2175 = vmatprep.subr.mxu0 0.0
        %2176 = vmatpush1.msra.mxu0 %v2097
        %2177 = vmatprep.subr.mxu0 0.0
        %2178 = vmatpush1.msra.mxu0 %v2098
        %2179 = vmatprep.subr.mxu0 0.0
        %2180 = vmatpush1.msra.mxu0 %v2099
        %2181 = vmatprep.subr.mxu0 0.0
        %2182 = vmatpush1.msra.mxu0 %v2100
        %2183 = vmatprep.subr.mxu0 0.0
        %2184 = vmatpush1.msra.mxu0 %v2101
        %2185 = vmatprep.subr.mxu0 0.0
        %2186 = vmatpush1.msra.mxu0 %v2102
        %2187 = vmatprep.subr.mxu0 0.0
        %2188 = vmatpush1.msra.mxu0 %v2103
        %2189 = vmatprep.subr.mxu0 0.0
        %2190 = vmatpush1.msra.mxu0 %v2104
        %2191 = vmatprep.subr.mxu0 0.0
        %2192 = vmatpush1.msra.mxu0 %v2105
        %2193 = vmatprep.subr.mxu0 0.0
        %2194 = vmatpush1.msra.mxu0 %v2106
        %2195 = vmatprep.subr.mxu0 0.0
        %2196 = vmatpush1.msra.mxu0 %v2107
        %2197 = vmatprep.subr.mxu0 0.0
        %2198 = vmatpush1.msra.mxu0 %v2108
        %2199 = vmatprep.subr.mxu0 0.0
        %2200 = vmatpush1.msra.mxu0 %v2109
        %2201 = vmatprep.subr.mxu0 0.0
        %2202 = vmatpush1.msra.mxu0 %v2110
        %2203 = vmatprep.subr.mxu0 0.0
        %2204 = vmatpush1.msra.mxu0 %v2111
        %2205 = vmatprep.subr.mxu0 0.0
        %2206 = vmatpush1.msra.mxu0 %v2112
        %2207 = vmatprep.subr.mxu0 0.0
        %2208 = vmatpush1.msra.mxu0 %v2113
        %2209 = vmatprep.subr.mxu0 0.0
        %2210 = vmatpush1.msra.mxu0 %v2114
        %2211 = vmatprep.subr.mxu0 0.0
        %2212 = vmatpush1.msra.mxu0 %v2115
        %2213 = vmatprep.subr.mxu0 0.0
        %2214 = vmatpush1.msra.mxu0 %v2116
        %2215 = vmatprep.subr.mxu0 0.0
        %2216 = vmatpush1.msra.mxu0 %v2117
        %2217 = vmatprep.subr.mxu0 0.0
        %2218 = vmatpush1.msra.mxu0 %v2118
        %2219 = vmatprep.subr.mxu0 0.0
        %2220 = vmatpush1.msra.mxu0 %v2119
        %2221 = vmatprep.subr.mxu0 0.0
        %2222 = vmatpush1.msra.mxu0 %v2120
        %2223 = vmatprep.subr.mxu0 0.0
        %2224 = vmatpush1.msra.mxu0 %v2121
        %2225 = vmatprep.mubr.f32.mxu0 %v2087
        %2226 = vmatmul.mubr.f32.gmra.mrb[0].mxu0 %v2086
        %v2227 = vpop.f32.mrb[0].mxu0
        %v2228 = vadd.f32 %v2159, %v2227
        %v2229 = vpop.f32.mrb[0].mxu0
        %2230 = vdwg.mxu0
        %2231 = vmatprep.subr.mxu0 0.0
        %2232 = vmatpush1.msra.mxu0 %v2122
        %2233 = vmatprep.subr.mxu0 0.0
        %2234 = vmatpush1.msra.mxu0 %v2123
        %2235 = vmatprep.subr.mxu0 0.0
        %2236 = vmatpush1.msra.mxu0 %v2124
        %2237 = vmatprep.subr.mxu0 0.0
        %2238 = vmatpush1.msra.mxu0 %v2125
        %2239 = vmatprep.subr.mxu0 0.0
        %2240 = vmatpush1.msra.mxu0 %v2126
        %2241 = vmatprep.subr.mxu0 0.0
        %2242 = vmatpush1.msra.mxu0 %v2127
        %2243 = vmatprep.subr.mxu0 0.0
        %2244 = vmatpush1.msra.mxu0 %v2128
        %2245 = vmatprep.subr.mxu0 0.0
        %2246 = vmatpush1.msra.mxu0 %v2129
        %2247 = vmatprep.subr.mxu0 0.0
        %2248 = vmatpush1.msra.mxu0 %v2130
        %2249 = vmatprep.subr.mxu0 0.0
        %2250 = vmatpush1.msra.mxu0 %v2131
        %2251 = vmatprep.subr.mxu0 0.0
        %2252 = vmatpush1.msra.mxu0 %v2132
        %2253 = vmatprep.subr.mxu0 0.0
        %2254 = vmatpush1.msra.mxu0 %v2133
        %2255 = vmatprep.subr.mxu0 0.0
        %2256 = vmatpush1.msra.mxu0 %v2134
        %2257 = vmatprep.subr.mxu0 0.0
        %2258 = vmatpush1.msra.mxu0 %v2135
        %2259 = vmatprep.subr.mxu0 0.0
        %2260 = vmatpush1.msra.mxu0 %v2136
        %2261 = vmatprep.subr.mxu0 0.0
        %2262 = vmatpush1.msra.mxu0 %v2137
        %2263 = vmatprep.subr.mxu0 0.0
        %2264 = vmatpush1.msra.mxu0 %v2138
        %2265 = vmatprep.subr.mxu0 0.0
        %2266 = vmatpush1.msra.mxu0 %v2139
        %2267 = vmatprep.subr.mxu0 0.0
        %2268 = vmatpush1.msra.mxu0 %v2140
        %2269 = vmatprep.subr.mxu0 0.0
        %2270 = vmatpush1.msra.mxu0 %v2141
        %2271 = vmatprep.subr.mxu0 0.0
        %2272 = vmatpush1.msra.mxu0 %v2142
        %2273 = vmatprep.subr.mxu0 0.0
        %2274 = vmatpush1.msra.mxu0 %v2143
        %2275 = vmatprep.subr.mxu0 0.0
        %2276 = vmatpush1.msra.mxu0 %v2144
        %2277 = vmatprep.subr.mxu0 0.0
        %2278 = vmatpush1.msra.mxu0 %v2145
        %2279 = vmatprep.subr.mxu0 0.0
        %2280 = vmatpush1.msra.mxu0 %v2146
        %2281 = vmatprep.subr.mxu0 0.0
        %2282 = vmatpush1.msra.mxu0 %v2147
        %2283 = vmatprep.subr.mxu0 0.0
        %2284 = vmatpush1.msra.mxu0 %v2148
        %2285 = vmatprep.subr.mxu0 0.0
        %2286 = vmatpush1.msra.mxu0 %v2149
        %2287 = vmatprep.subr.mxu0 0.0
        %2288 = vmatpush1.msra.mxu0 %v2150
        %2289 = vmatprep.subr.mxu0 0.0
        %2290 = vmatpush1.msra.mxu0 %v2151
        %2291 = vmatprep.subr.mxu0 0.0
        %2292 = vmatpush1.msra.mxu0 %v2152
        %2293 = vmatprep.subr.mxu0 0.0
        %2294 = vmatpush1.msra.mxu0 %v2153
        %2295 = vmatprep.mubr.f32.mxu0 %v2089
        %2296 = vmatmul.mubr.f32.gmra.mrb[0].mxu0 %v2088
        %v2297 = vpop.f32.mrb[0].mxu0
        %v2298 = vadd.f32 %v2228, %v2297
        %v2299 = vpop.f32.mrb[0].mxu0
        %2300 = vdwg.mxu0
        %2301 = vst.msk [vmem:[%s242] sm:$0xff] %vm248, %v2298
        %s2302 = sand.u32 %s159, 1
        %s2303 = scalar_lea.sflag [#allocation3], %s2302
        %s2304 = sand.u32 %s159, 1
        %s2305 = smul.addr %s2304, 8
        %s2306 = scalar_lea.vmem [#allocation2], %s2305
        // Predicated region
        $region45: #{tpu_custom_call.1} parent=43 // pred_check
          %p2307 = pneg %p169
        $region46: #{tpu_custom_call.1} parent=43 // pred_check_branch
          %2309 = sbr.rel (%p2307) target = $region48
        $region47: #{tpu_custom_call.1} parent=43 // pred_region
          %s2311 = ssub.s32 128, 128
          %2312 = vsyncadd %s2303, %s2311
          %s2313 = smul.addr %s20, 128
          %s2314 = scalar_lea.hbm %s6, %s2313
          %s2316 = sshll.u32 %s2306, 4
          %s2317 = int_to_ptr.vmem [resolvable:$true] %s2316
          %2319 = dma.vmem_to_hbm [thread:$0]  %s2317, 128, %s2314, %s2303
        $region48: #{tpu_custom_call.1} parent=43 // pred_fallthru
          _
      $region44: #{tpu_custom_call.1} parent=5 // pred_fallthru
        _
      %p2320 = scmp.le.s32.totalorder 2, %s15
      // Predicated region
      $region49: #{tpu_custom_call.1} parent=5 // pred_check
        %p2321 = pneg %p2320
      $region50: #{tpu_custom_call.1} parent=5 // pred_check_branch
        %2323 = sbr.rel (%p2321) target = $region52
      $region51: #{tpu_custom_call.1} parent=5 // pred_region
        %s2324 = ssub.s32 %s15, 2
        // Predicated region
        $region53: #{tpu_custom_call.1} parent=51 // pred_check
          %p2325 = pneg %p175
        $region54: #{tpu_custom_call.1} parent=51 // pred_check_branch
          %2327 = sbr.rel (%p2325) target = $region56
        $region55: #{tpu_custom_call.1} parent=51 // pred_region
          %s2328 = sand.u32 %s160, 1
          %s2329 = scalar_lea.sflag [#allocation3], %s2328
          %s2330 = sand.u32 %s160, 1
          %s2331 = smul.addr %s2330, 8
          %s2332 = scalar_lea.vmem [#allocation2], %s2331
          %2333 = dma.done %s2329, 128
        $region56: #{tpu_custom_call.1} parent=51 // pred_fallthru
          _
      $region52: #{tpu_custom_call.1} parent=5 // pred_fallthru
        _
    $region6: #{tpu_custom_call.1} parent=1 // loop_footer
      %s19 = sadd.s32 1, %s15
    $region7: #{tpu_custom_call.1} parent=1 // loop_footer_branch
      %14 = sbr.rel target = $region3
    $region8: #{tpu_custom_call.1} parent=1 // loop_exit
      _
    %2334 = vsyncpa [#allocation3], 1
    %s2335 = scalar_lea.sflag [#allocation3], 1
    %2336 = vsyncpa %s2335, 1

</llo_original>
